<compile_context>
chip_gen: v6e
topology: v6e:2x2x1
jax: 0.10.0
libtpu: 0.0.40
codegen_flags: <defaults>
</compile_context>

<pallas_src>
import math

import jax
import jax.numpy as jnp
from jax.experimental import pallas as pl
from jax.experimental.pallas import tpu as pltpu


_SQRT_2_OVER_PI = math.sqrt(2.0 / math.pi)
_GELU_CUBIC = _SQRT_2_OVER_PI * 0.044715


def _gelu_new(x):
    # GPT-2 "new gelu" (tanh approximation). Constants folded and x*x reused so
    # the VALU op count stays low (matters on v5e); tanh goes to the EUP slot.
    x_sq = x * x
    inner = x * (_SQRT_2_OVER_PI + _GELU_CUBIC * x_sq)
    return 0.5 * x * (1.0 + jnp.tanh(inner))


def _round_up(x, m):
    return ((x + m - 1) // m) * m


def _vmem_capacity_bytes():
    """Physical VMEM per core; conservative 64 MiB (v7x) if the query fails."""
    try:
        cap = getattr(pltpu.get_tpu_info(), "vmem_capacity_bytes", None)
        if cap:
            return int(cap)
    except Exception:
        pass
    return 64 << 20


# ----------------------------------------------------------------------------
# Kernels
# ----------------------------------------------------------------------------
def _mlp_resident_kernel(x_ref, w_in_ref, b_in_ref, w_out_ref, b_out_ref, o_ref):
    # Weights / biases are VMEM-resident (constant block index): one grid axis
    # over row tiles, no accumulator, no init/finalize predication.
    x = x_ref[...].astype(jnp.bfloat16)                       # in-kernel cast (VPU)
    pre = jnp.dot(x, w_in_ref[...],
                  preferred_element_type=jnp.float32) + b_in_ref[...]
    post = _gelu_new(pre)                                     # f32
    out = jnp.dot(post.astype(jnp.bfloat16), w_out_ref[...],
                  preferred_element_type=jnp.float32) + b_out_ref[...]
    o_ref[...] = out.astype(o_ref.dtype)


def _mlp_reduction_kernel(x_ref, w_in_ref, b_in_ref, w_out_ref, b_out_ref,
                          o_ref, acc_ref):
    # Fallback for configurations whose weights do not fit VMEM: d_mlp is an
    # "arbitrary" reduction axis; accumulate in an f32 VMEM scratch.
    k = pl.program_id(1)

    @pl.when(k == 0)
    def _init():
        acc_ref[...] = jnp.zeros_like(acc_ref)

    x = x_ref[...].astype(jnp.bfloat16)
    pre = jnp.dot(x, w_in_ref[...],
                  preferred_element_type=jnp.float32) + b_in_ref[...]
    post = _gelu_new(pre)
    acc_ref[...] += jnp.dot(post.astype(jnp.bfloat16), w_out_ref[...],
                            preferred_element_type=jnp.float32)

    @pl.when(k == pl.num_programs(1) - 1)
    def _finalize():
        o_ref[...] = (acc_ref[...] + b_out_ref[...]).astype(o_ref.dtype)


# ----------------------------------------------------------------------------
# Wrapper
# ----------------------------------------------------------------------------
def mlp_pallas(x, w_in, b_in, w_out, b_out, *, tm=512, tk=1024, out_dtype=None):
    """GPT-2 MLP forward: (batch, position, d_model) -> (batch, position, d_model)."""
    batch, pos, d_model = x.shape
    d_mlp = w_in.shape[1]
    rows = batch * pos
    if out_dtype is None:
        out_dtype = x.dtype

    vmem_cap = _vmem_capacity_bytes()
    vmem_budget = (vmem_cap * 4) // 5        # ~80%: leave headroom (esp. v7x 64 MiB)

    # ---- row tile -----------------------------------------------------------
    if rows < 128:
        tm = _round_up(max(rows, 8), 8)
    else:
        # multiples of 128 keep the MXU M-stream and the output store dense
        tm = min(_round_up(tm, 128), _round_up(rows, 128))

    bias_bytes = (d_mlp + d_model) * 4

    def resident_est(tm_):
        # Worst case (weights double-buffered, in case pl.Buffered(1) is
        # unavailable) + the in-kernel intermediates (pre f32, post/x bf16).
        weights = 2 * 2 * 2 * d_model * d_mlp                   # bf16, 2 weights, 2 bufs
        io_tiles = 2 * 2 * tm_ * d_model * 4                    # x + out tiles, f32, 2 bufs
        interm = tm_ * d_mlp * (4 + 2) + tm_ * d_model * 2
        return weights + io_tiles + interm + bias_bytes

    # Shrink tm (down to 128) until the resident estimate fits the VMEM budget.
    for _ in range(8):
        if tm <= 128 or resident_est(tm) <= vmem_budget:
            break
        tm = max(128, _round_up(tm // 2, 128))

    use_resident = resident_est(tm) <= vmem_budget

    rows_p = _round_up(rows, tm)
    grid_m = rows_p // tm

    # ---- operands -----------------------------------------------------------
    x2 = x.reshape(rows, d_model)
    if rows_p != rows:                       # rare: only if tm does not divide rows
        x2 = jnp.pad(x2, ((0, rows_p - rows), (0, 0)))
    # One-off weight cast: resident weights enter VMEM exactly once per call,
    # streamed weights (fallback) move at half the f32 HBM traffic.
    w_in_b = w_in.astype(jnp.bfloat16)
    w_out_b = w_out.astype(jnp.bfloat16)
    b_in2 = b_in.reshape(1, d_mlp).astype(jnp.float32)
    b_out2 = b_out.reshape(1, d_model).astype(jnp.float32)

    cost = pl.CostEstimate(
        flops=2 * 2 * rows_p * d_model * d_mlp,
        transcendentals=rows_p * d_mlp,
        bytes_accessed=(rows_p * d_model * jnp.dtype(x2.dtype).itemsize
                        + (w_in_b.size + w_out_b.size) * 2
                        + (b_in2.size + b_out2.size) * 4
                        + rows_p * d_model * jnp.dtype(out_dtype).itemsize),
    )

    if use_resident:
        vmem_limit = int(min(vmem_budget,
                             max(resident_est(tm) * 13 // 10, 32 << 20)))

        def build(single_buffer_weights):
            mode = ({"pipeline_mode": pl.Buffered(1)}
                    if single_buffer_weights else {})
            return pl.pallas_call(
                _mlp_resident_kernel,
                out_shape=jax.ShapeDtypeStruct((rows_p, d_model), out_dtype),
                grid_spec=pltpu.PrefetchScalarGridSpec(
                    num_scalar_prefetch=0,
                    grid=(grid_m,),
                    in_specs=[
                        pl.BlockSpec((tm, d_model), lambda i: (i, 0)),            # x rows
                        pl.BlockSpec((d_model, d_mlp), lambda i: (0, 0), **mode),  # W_in
                        pl.BlockSpec((1, d_mlp), lambda i: (0, 0), **mode),        # b_in
                        pl.BlockSpec((d_mlp, d_model), lambda i: (0, 0), **mode),  # W_out
                        pl.BlockSpec((1, d_model), lambda i: (0, 0), **mode),      # b_out
                    ],
                    out_specs=pl.BlockSpec((tm, d_model), lambda i: (i, 0)),
                ),
                compiler_params=pltpu.CompilerParams(
                    dimension_semantics=("parallel",),
                    vmem_limit_bytes=vmem_limit,
                ),
                cost_estimate=cost,
            )

        try:
            out2 = build(True)(x2, w_in_b, b_in2, w_out_b, b_out2)
        except Exception:
            # pl.Buffered(1) unsupported on this JAX build: weights stay
            # default double-buffered (still fetched only once - constant index).
            out2 = build(False)(x2, w_in_b, b_in2, w_out_b, b_out2)
    else:
        # ---- reduction-tiled fallback (weights streamed) --------------------
        tk = min(tk, d_mlp)
        if (d_mlp % tk != 0) or (tk % 128 != 0):
            tk = d_mlp                      # full-extent block is always legal
        est = (2 * tm * d_model * 4         # x tiles (f32, double-buffered)
               + 2 * d_model * tk * 2       # W_in tiles (bf16)
               + 2 * tk * d_model * 2       # W_out tiles (bf16)
               + 2 * bias_bytes
               + 2 * tm * d_model * 4       # output tiles
               + tm * d_model * 4           # accumulator
               + tm * tk * (4 + 2)          # pre (f32) + post (bf16)
               + tm * d_model * 2)          # bf16 x cast
        vmem_limit = int(min(vmem_budget, max(est * 13 // 10, 32 << 20)))

        out2 = pl.pallas_call(
            _mlp_reduction_kernel,
            out_shape=jax.ShapeDtypeStruct((rows_p, d_model), out_dtype),
            grid_spec=pltpu.PrefetchScalarGridSpec(
                num_scalar_prefetch=0,
                grid=(grid_m, d_mlp // tk),
                in_specs=[
                    pl.BlockSpec((tm, d_model), lambda i, k: (i, 0)),     # x rows
                    pl.BlockSpec((d_model, tk), lambda i, k: (0, k)),     # W_in[:, k]
                    pl.BlockSpec((1, tk), lambda i, k: (0, k)),           # b_in[k]
                    pl.BlockSpec((tk, d_model), lambda i, k: (k, 0)),     # W_out[k, :]
                    pl.BlockSpec((1, d_model), lambda i, k: (0, 0)),      # b_out
                ],
                out_specs=pl.BlockSpec((tm, d_model), lambda i, k: (i, 0)),
                scratch_shapes=[pltpu.VMEM((tm, d_model), jnp.float32)],
            ),
            compiler_params=pltpu.CompilerParams(
                dimension_semantics=("parallel", "arbitrary"),
                vmem_limit_bytes=vmem_limit,
            ),
            cost_estimate=cost,
        )(x2, w_in_b, b_in2, w_out_b, b_out2)

    return out2[:rows].reshape(batch, pos, d_model)


# ----------------------------------------------------------------------------
# Self-test
# ----------------------------------------------------------------------------
if __name__ == "__main__":
    def make_case(key, batch, pos, d_model, d_mlp, init_range=0.02):
        k_x, k_wi, k_bi, k_wo, k_bo = jax.random.split(key, 5)
        x = jax.random.normal(k_x, (batch, pos, d_model), dtype=jnp.float32)
        w_in = init_range * jax.random.normal(k_wi, (d_model, d_mlp), dtype=jnp.float32)
        b_in = 0.1 * jax.random.normal(k_bi, (d_mlp,), dtype=jnp.float32)
        w_out = init_range * jax.random.normal(k_wo, (d_mlp, d_model), dtype=jnp.float32)
        b_out = 0.1 * jax.random.normal(k_bo, (d_model,), dtype=jnp.float32)
        return x, w_in, b_in, w_out, b_out

    def ref_bf16(x, w_in, b_in, w_out, b_out):
        # Same bf16-inputs / f32-accumulation recipe as the kernel.
        b, p, d = x.shape
        x2 = x.reshape(b * p, d).astype(jnp.bfloat16)
        pre = jnp.dot(x2, w_in.astype(jnp.bfloat16),
                      preferred_element_type=jnp.float32) + b_in
        post = _gelu_new(pre)
        out = jnp.dot(post.astype(jnp.bfloat16), w_out.astype(jnp.bfloat16),
                      preferred_element_type=jnp.float32) + b_out
        return out.reshape(b, p, d)

    def ref_f32(x, w_in, b_in, w_out, b_out):
        pre = jnp.einsum("bpd,dm->bpm", x, w_in) + b_in
        post = _gelu_new(pre)
        return jnp.einsum("bpm,md->bpd", post, w_out) + b_out

    key = jax.random.PRNGKey(0)
    k1, k2 = jax.random.split(key)

    # Case 1: small shapes consistent with a scaled-down Config (single row tile).
    case1 = make_case(k1, batch=2, pos=8, d_model=128, d_mlp=512)
    out1 = jax.block_until_ready(mlp_pallas(*case1))
    assert jnp.allclose(out1, ref_bf16(*case1), atol=2e-3, rtol=2e-3), \
        "case1 mismatch vs bf16 reference"
    assert jnp.allclose(out1, ref_f32(*case1), atol=2e-2, rtol=2e-2), \
        "case1 mismatch vs f32 reference"

    # Case 2: multiple row tiles + row padding (exercises the parallel grid axis).
    case2 = make_case(k2, batch=3, pos=200, d_model=128, d_mlp=512)
    out2 = jax.block_until_ready(mlp_pallas(*case2))
    assert jnp.allclose(out2, ref_bf16(*case2), atol=2e-3, rtol=2e-3), \
        "case2 mismatch vs bf16 reference"
    assert jnp.allclose(out2, ref_f32(*case2), atol=2e-2, rtol=2e-2), \
        "case2 mismatch vs f32 reference"

    print("KERNEL_OK")
</pallas_src>

<mosaic_0001>
module attributes {stable_mosaic.version = 11 : i64} {
  func.func @_mlp_resident_kernel(%arg0: i32, %arg1: memref<16x128xf32, #tpu.memory_space<vmem>>, %arg2: memref<128x512xbf16, #tpu.memory_space<vmem>>, %arg3: memref<1x512xf32, #tpu.memory_space<vmem>>, %arg4: memref<512x128xbf16, #tpu.memory_space<vmem>>, %arg5: memref<1x128xf32, #tpu.memory_space<vmem>>, %arg6: memref<16x128xf32, #tpu.memory_space<vmem>>) attributes {dimension_semantics = [#tpu.dimension_semantics<parallel>], iteration_bounds = array<i64: 1>, scalar_prefetch = 0 : i64, scratch_operands = 0 : i64, tpu.core_type = #tpu.core_type<tc>, window_params = [{transform_indices = @transform_0, window_bounds = array<i64: 16, 128>}, {pipeline_mode = #tpu.pipeline_mode<synchronous>, transform_indices = @transform_1, window_bounds = array<i64: 128, 512>}, {pipeline_mode = #tpu.pipeline_mode<synchronous>, transform_indices = @transform_2, window_bounds = array<i64: 1, 512>}, {pipeline_mode = #tpu.pipeline_mode<synchronous>, transform_indices = @transform_3, window_bounds = array<i64: 512, 128>}, {pipeline_mode = #tpu.pipeline_mode<synchronous>, transform_indices = @transform_4, window_bounds = array<i64: 1, 128>}, {transform_indices = @transform_5, window_bounds = array<i64: 16, 128>}]} {
    %c0 = arith.constant 0 : index
    %c0_0 = arith.constant 0 : index
    %0 = vector.load %arg1[%c0, %c0_0] : memref<16x128xf32, #tpu.memory_space<vmem>>, vector<16x128xf32>
    %1 = arith.truncf %0 : vector<16x128xf32> to vector<16x128xbf16>
    %c0_1 = arith.constant 0 : index
    %c0_2 = arith.constant 0 : index
    %2 = vector.load %arg2[%c0_1, %c0_2] : memref<128x512xbf16, #tpu.memory_space<vmem>>, vector<128x512xbf16>
    %cst = arith.constant dense<0.000000e+00> : vector<16x512xf32>
    %3 = tpu.matmul %1, %2, %cst {dimension_numbers = #tpu.dot_dimension_numbers<[1], [0], [0], [1], [0, 0, 1, 1], [], []>} : vector<16x128xbf16>, vector<128x512xbf16>, vector<16x512xf32> -> vector<16x512xf32>
    %c0_3 = arith.constant 0 : index
    %c0_4 = arith.constant 0 : index
    %4 = vector.load %arg3[%c0_3, %c0_4] : memref<1x512xf32, #tpu.memory_space<vmem>>, vector<1x512xf32>
    %5 = vector.broadcast %4 : vector<1x512xf32> to vector<16x512xf32>
    %6 = arith.addf %3, %5 : vector<16x512xf32>
    %7 = arith.mulf %6, %6 : vector<16x512xf32>
    %cst_5 = arith.constant 0.0356774069 : f32
    %8 = vector.broadcast %cst_5 : f32 to vector<16x512xf32>
    %9 = arith.mulf %8, %7 : vector<16x512xf32>
    %cst_6 = arith.constant 0.797884583 : f32
    %10 = vector.broadcast %cst_6 : f32 to vector<16x512xf32>
    %11 = arith.addf %10, %9 : vector<16x512xf32>
    %12 = arith.mulf %6, %11 : vector<16x512xf32>
    %cst_7 = arith.constant 5.000000e-01 : f32
    %13 = vector.broadcast %cst_7 : f32 to vector<16x512xf32>
    %14 = arith.mulf %13, %6 : vector<16x512xf32>
    %15 = math.tanh %12 : vector<16x512xf32>
    %cst_8 = arith.constant 1.000000e+00 : f32
    %16 = vector.broadcast %cst_8 : f32 to vector<16x512xf32>
    %17 = arith.addf %16, %15 : vector<16x512xf32>
    %18 = arith.mulf %14, %17 : vector<16x512xf32>
    %19 = arith.truncf %18 : vector<16x512xf32> to vector<16x512xbf16>
    %c0_9 = arith.constant 0 : index
    %c0_10 = arith.constant 0 : index
    %20 = vector.load %arg4[%c0_9, %c0_10] : memref<512x128xbf16, #tpu.memory_space<vmem>>, vector<512x128xbf16>
    %cst_11 = arith.constant dense<0.000000e+00> : vector<16x128xf32>
    %21 = tpu.matmul %19, %20, %cst_11 {dimension_numbers = #tpu.dot_dimension_numbers<[1], [0], [0], [1], [0, 0, 1, 1], [], []>} : vector<16x512xbf16>, vector<512x128xbf16>, vector<16x128xf32> -> vector<16x128xf32>
    %c0_12 = arith.constant 0 : index
    %c0_13 = arith.constant 0 : index
    %22 = vector.load %arg5[%c0_12, %c0_13] : memref<1x128xf32, #tpu.memory_space<vmem>>, vector<1x128xf32>
    %23 = vector.broadcast %22 : vector<1x128xf32> to vector<16x128xf32>
    %24 = arith.addf %21, %23 : vector<16x128xf32>
    %c0_14 = arith.constant 0 : index
    %c0_15 = arith.constant 0 : index
    %25 = vector.load %arg6[%c0_14, %c0_15] : memref<16x128xf32, #tpu.memory_space<vmem>>, vector<16x128xf32>
    tpu.vector_store %arg6[%c0_14, %c0_15], %24 {strides = array<i32>} : memref<16x128xf32, #tpu.memory_space<vmem>>, vector<16x128xf32>,
    return
  }
  func.func @transform_0(%arg0: i32) -> (i32, i32) {
    %c0_i32 = arith.constant 0 : i32
    %c0_i32_0 = arith.constant 0 : i32
    return %arg0, %c0_i32 : i32, i32
  }
  func.func @transform_1(%arg0: i32) -> (i32, i32) {
    %c0_i32 = arith.constant 0 : i32
    %c0_i32_0 = arith.constant 0 : i32
    %c0_i32_1 = arith.constant 0 : i32
    return %c0_i32, %c0_i32_0 : i32, i32
  }
  func.func @transform_2(%arg0: i32) -> (i32, i32) {
    %c0_i32 = arith.constant 0 : i32
    %c0_i32_0 = arith.constant 0 : i32
    %c0_i32_1 = arith.constant 0 : i32
    return %c0_i32, %c0_i32_0 : i32, i32
  }
  func.func @transform_3(%arg0: i32) -> (i32, i32) {
    %c0_i32 = arith.constant 0 : i32
    %c0_i32_0 = arith.constant 0 : i32
    %c0_i32_1 = arith.constant 0 : i32
    return %c0_i32, %c0_i32_0 : i32, i32
  }
  func.func @transform_4(%arg0: i32) -> (i32, i32) {
    %c0_i32 = arith.constant 0 : i32
    %c0_i32_0 = arith.constant 0 : i32
    %c0_i32_1 = arith.constant 0 : i32
    return %c0_i32, %c0_i32_0 : i32, i32
  }
  func.func @transform_5(%arg0: i32) -> (i32, i32) {
    %c0_i32 = arith.constant 0 : i32
    %c0_i32_0 = arith.constant 0 : i32
    return %arg0, %c0_i32 : i32, i32
  }
}

module attributes {stable_mosaic.version = 11 : i64} {
  func.func @_mlp_resident_kernel(%arg0: i32, %arg1: memref<16x128xf32, #tpu.memory_space<vmem>>, %arg2: memref<128x512xbf16, #tpu.memory_space<vmem>>, %arg3: memref<1x512xf32, #tpu.memory_space<vmem>>, %arg4: memref<512x128xbf16, #tpu.memory_space<vmem>>, %arg5: memref<1x128xf32, #tpu.memory_space<vmem>>, %arg6: memref<16x128xf32, #tpu.memory_space<vmem>>) attributes {dimension_semantics = [#tpu.dimension_semantics<parallel>], iteration_bounds = array<i64: 1>, scalar_prefetch = 0 : i64, scratch_operands = 0 : i64, tpu.core_type = #tpu.core_type<tc>, window_params = [{transform_indices = @transform_0, window_bounds = array<i64: 16, 128>}, {pipeline_mode = #tpu.pipeline_mode<synchronous>, transform_indices = @transform_1, window_bounds = array<i64: 128, 512>}, {pipeline_mode = #tpu.pipeline_mode<synchronous>, transform_indices = @transform_2, window_bounds = array<i64: 1, 512>}, {pipeline_mode = #tpu.pipeline_mode<synchronous>, transform_indices = @transform_3, window_bounds = array<i64: 512, 128>}, {pipeline_mode = #tpu.pipeline_mode<synchronous>, transform_indices = @transform_4, window_bounds = array<i64: 1, 128>}, {transform_indices = @transform_5, window_bounds = array<i64: 16, 128>}]} {
    %c0 = arith.constant 0 : index
    %c0_0 = arith.constant 0 : index
    %0 = vector.load %arg1[%c0, %c0_0] : memref<16x128xf32, #tpu.memory_space<vmem>>, vector<16x128xf32>
    %1 = arith.truncf %0 : vector<16x128xf32> to vector<16x128xbf16>
    %c0_1 = arith.constant 0 : index
    %c0_2 = arith.constant 0 : index
    %2 = vector.load %arg2[%c0_1, %c0_2] : memref<128x512xbf16, #tpu.memory_space<vmem>>, vector<128x512xbf16>
    %cst = arith.constant dense<0.000000e+00> : vector<16x512xf32>
    %3 = tpu.matmul %1, %2, %cst {dimension_numbers = #tpu.dot_dimension_numbers<[1], [0], [0], [1], [0, 0, 1, 1], [], []>} : vector<16x128xbf16>, vector<128x512xbf16>, vector<16x512xf32> -> vector<16x512xf32>
    %c0_3 = arith.constant 0 : index
    %c0_4 = arith.constant 0 : index
    %4 = vector.load %arg3[%c0_3, %c0_4] : memref<1x512xf32, #tpu.memory_space<vmem>>, vector<1x512xf32>
    %5 = vector.broadcast %4 : vector<1x512xf32> to vector<16x512xf32>
    %6 = arith.addf %3, %5 : vector<16x512xf32>
    %7 = arith.mulf %6, %6 : vector<16x512xf32>
    %cst_5 = arith.constant 0.0356774069 : f32
    %8 = vector.broadcast %cst_5 : f32 to vector<16x512xf32>
    %9 = arith.mulf %8, %7 : vector<16x512xf32>
    %cst_6 = arith.constant 0.797884583 : f32
    %10 = vector.broadcast %cst_6 : f32 to vector<16x512xf32>
    %11 = arith.addf %10, %9 : vector<16x512xf32>
    %12 = arith.mulf %6, %11 : vector<16x512xf32>
    %cst_7 = arith.constant 5.000000e-01 : f32
    %13 = vector.broadcast %cst_7 : f32 to vector<16x512xf32>
    %14 = arith.mulf %13, %6 : vector<16x512xf32>
    %15 = math.tanh %12 : vector<16x512xf32>
    %cst_8 = arith.constant 1.000000e+00 : f32
    %16 = vector.broadcast %cst_8 : f32 to vector<16x512xf32>
    %17 = arith.addf %16, %15 : vector<16x512xf32>
    %18 = arith.mulf %14, %17 : vector<16x512xf32>
    %19 = arith.truncf %18 : vector<16x512xf32> to vector<16x512xbf16>
    %c0_9 = arith.constant 0 : index
    %c0_10 = arith.constant 0 : index
    %20 = vector.load %arg4[%c0_9, %c0_10] : memref<512x128xbf16, #tpu.memory_space<vmem>>, vector<512x128xbf16>
    %cst_11 = arith.constant dense<0.000000e+00> : vector<16x128xf32>
    %21 = tpu.matmul %19, %20, %cst_11 {dimension_numbers = #tpu.dot_dimension_numbers<[1], [0], [0], [1], [0, 0, 1, 1], [], []>} : vector<16x512xbf16>, vector<512x128xbf16>, vector<16x128xf32> -> vector<16x128xf32>
    %c0_12 = arith.constant 0 : index
    %c0_13 = arith.constant 0 : index
    %22 = vector.load %arg5[%c0_12, %c0_13] : memref<1x128xf32, #tpu.memory_space<vmem>>, vector<1x128xf32>
    %23 = vector.broadcast %22 : vector<1x128xf32> to vector<16x128xf32>
    %24 = arith.addf %21, %23 : vector<16x128xf32>
    %c0_14 = arith.constant 0 : index
    %c0_15 = arith.constant 0 : index
    %25 = vector.load %arg6[%c0_14, %c0_15] : memref<16x128xf32, #tpu.memory_space<vmem>>, vector<16x128xf32>
    tpu.vector_store %arg6[%c0_14, %c0_15], %24 {strides = array<i32>} : memref<16x128xf32, #tpu.memory_space<vmem>>, vector<16x128xf32>,
    return
  }
  func.func @transform_0(%arg0: i32) -> (i32, i32) {
    %c0_i32 = arith.constant 0 : i32
    %c0_i32_0 = arith.constant 0 : i32
    return %arg0, %c0_i32 : i32, i32
  }
  func.func @transform_1(%arg0: i32) -> (i32, i32) {
    %c0_i32 = arith.constant 0 : i32
    %c0_i32_0 = arith.constant 0 : i32
    %c0_i32_1 = arith.constant 0 : i32
    return %c0_i32, %c0_i32_0 : i32, i32
  }
  func.func @transform_2(%arg0: i32) -> (i32, i32) {
    %c0_i32 = arith.constant 0 : i32
    %c0_i32_0 = arith.constant 0 : i32
    %c0_i32_1 = arith.constant 0 : i32
    return %c0_i32, %c0_i32_0 : i32, i32
  }
  func.func @transform_3(%arg0: i32) -> (i32, i32) {
    %c0_i32 = arith.constant 0 : i32
    %c0_i32_0 = arith.constant 0 : i32
    %c0_i32_1 = arith.constant 0 : i32
    return %c0_i32, %c0_i32_0 : i32, i32
  }
  func.func @transform_4(%arg0: i32) -> (i32, i32) {
    %c0_i32 = arith.constant 0 : i32
    %c0_i32_0 = arith.constant 0 : i32
    %c0_i32_1 = arith.constant 0 : i32
    return %c0_i32, %c0_i32_0 : i32, i32
  }
  func.func @transform_5(%arg0: i32) -> (i32, i32) {
    %c0_i32 = arith.constant 0 : i32
    %c0_i32_0 = arith.constant 0 : i32
    return %arg0, %c0_i32 : i32, i32
  }
}

</mosaic_0001>

<llo_original>
// kernel: tpu_custom_call.1
$region0: #{tpu_custom_call.1}
  #allocation0 [shape = 'u32[]', space=smem, size = 0x4, offset = 0x4, fixed_abs, tag = 'smem constant byte address 0x4 - core index']
  #allocation1 [shape = 'u32[144,128]{1,0:T(1,128)}', space=vmem, size = 0x12000, scoped, tag = 'internal scratch']
  %s0 = inlined_call_operand.hbm [shape: f32[16,128], index: 0, kind: input, shape index: {}]
  %s1 = inlined_call_operand.hbm [shape: bf16[128,512], index: 1, kind: input, shape index: {}]
  %s2 = inlined_call_operand.hbm [shape: f32[1,512], index: 2, kind: input, shape index: {}]
  %s3 = inlined_call_operand.hbm [shape: bf16[512,128], index: 3, kind: input, shape index: {}]
  %s4 = inlined_call_operand.vmem [shape: f32[1,128], index: 4, kind: input, shape index: {}]
  %s5 = inlined_call_operand.hbm [shape: f32[16,128], index: 5, kind: output, shape index: {}]
  %s6 = sld [smem:[#allocation0]]
  $region46: #{tpu_custom_call.1} parent=0
    _
  %s8 = ssub.s32 1, %s6
  %s9 = scalar_select 0, %s8, %s6
  $region1: #{tpu_custom_call.1} parent=0
    #allocation2 [shape = 'u8[8192]{0}', space=vmem, size = 0x2000, scoped, tag = 'input window, operand 0, single buffered']
    #allocation3 [shape = 's32[1]{0}', space=sflag, size = 0x4, scoped, tag = 'scoped memory for tpu_custom_call.1']
    #allocation4 [shape = 's32[1]{0}', space=sflag, size = 0x4, scoped, tag = 'scoped memory for tpu_custom_call.1']
    #allocation5 [shape = 'u8[131072]{0}', space=vmem, size = 0x20000, scoped, tag = 'input window, operand 1, single buffered']
    #allocation6 [shape = 's32[1]{0}', space=sflag, size = 0x4, scoped, tag = 'scoped memory for tpu_custom_call.1']
    #allocation7 [shape = 'u8[2048]{0}', space=vmem, size = 0x800, scoped, tag = 'input window, operand 2, single buffered']
    #allocation8 [shape = 'u8[131072]{0}', space=vmem, size = 0x20000, scoped, tag = 'input window, operand 3, single buffered']
    #allocation9 [shape = 's32[1]{0}', space=sflag, size = 0x4, scoped, tag = 'scoped memory for tpu_custom_call.1']
    #allocation10 [shape = 'u8[8192]{0}', space=vmem, size = 0x2000, scoped, tag = 'output window, operand 0, single buffered']
    %10 = vsyncpa [#allocation3], 0
    %11 = vsyncpa [#allocation6], 0
    %12 = vsyncpa [#allocation9], 0
    %13 = vsyncpa [#allocation4], 0
    // Predicated region
    $region2: #{tpu_custom_call.1} parent=1 // pred_check
      _
    $region3: #{tpu_custom_call.1} parent=1 // pred_check_branch
      %15 = sbr.rel (0) target = $region5
    $region4: #{tpu_custom_call.1} parent=1 // pred_region
      %s17 = ssub.s32 256, 256
      %18 = vsyncadd [#allocation3], %s17
      %s19 = sshll.u32 [#allocation2], 4
      %s20 = int_to_ptr.vmem [resolvable:$true] %s19
      %25 = dma.hbm_to_vmem [thread:$0]  %s0, 256, %s20, [#allocation3], 128, 128, 8
    $region5: #{tpu_custom_call.1} parent=1 // pred_fallthru
      _
    // Predicated region
    $region6: #{tpu_custom_call.1} parent=1 // pred_check
      _
    $region7: #{tpu_custom_call.1} parent=1 // pred_check_branch
      %27 = sbr.rel (0) target = $region9
    $region8: #{tpu_custom_call.1} parent=1 // pred_region
      %s29 = ssub.s32 4096, 4096
      %30 = vsyncadd [#allocation6], %s29
      %s31 = sshll.u32 [#allocation5], 4
      %s32 = int_to_ptr.vmem [resolvable:$true] %s31
      %37 = dma.hbm_to_vmem [thread:$0]  %s1, 4096, %s32, [#allocation6], 256, 256, 16
    $region9: #{tpu_custom_call.1} parent=1 // pred_fallthru
      _
    // Predicated region
    $region10: #{tpu_custom_call.1} parent=1 // pred_check
      _
    $region11: #{tpu_custom_call.1} parent=1 // pred_check_branch
      %39 = sbr.rel (0) target = $region13
    $region12: #{tpu_custom_call.1} parent=1 // pred_region
      %s41 = ssub.s32 64, 64
      %42 = vsyncadd [#allocation6], %s41
      %s44 = sshll.u32 [#allocation7], 4
      %s45 = int_to_ptr.vmem [resolvable:$true] %s44
      %47 = dma.hbm_to_vmem [thread:$0]  %s2, 64, %s45, [#allocation6]
    $region13: #{tpu_custom_call.1} parent=1 // pred_fallthru
      _
    // Predicated region
    $region14: #{tpu_custom_call.1} parent=1 // pred_check
      _
    $region15: #{tpu_custom_call.1} parent=1 // pred_check_branch
      %49 = sbr.rel (0) target = $region17
    $region16: #{tpu_custom_call.1} parent=1 // pred_region
      %s51 = ssub.s32 4096, 4096
      %52 = vsyncadd [#allocation9], %s51
      %s53 = sshll.u32 [#allocation8], 4
      %s54 = int_to_ptr.vmem [resolvable:$true] %s53
      %59 = dma.hbm_to_vmem [thread:$0]  %s3, 4096, %s54, [#allocation9], 64, 64, 4
    $region17: #{tpu_custom_call.1} parent=1 // pred_fallthru
      _
    // Predicated region
    $region18: #{tpu_custom_call.1} parent=1 // pred_check
      _
    $region19: #{tpu_custom_call.1} parent=1 // pred_check_branch
      %61 = sbr.rel (0) target = $region21
    $region20: #{tpu_custom_call.1} parent=1 // pred_region
      _
    $region21: #{tpu_custom_call.1} parent=1 // pred_fallthru
      _
    // Predicated region
    $region22: #{tpu_custom_call.1} parent=1 // pred_check
      _
    $region23: #{tpu_custom_call.1} parent=1 // pred_check_branch
      %63 = sbr.rel (0) target = $region25
    $region24: #{tpu_custom_call.1} parent=1 // pred_region
      %64 = dma.done [#allocation3], 256
    $region25: #{tpu_custom_call.1} parent=1 // pred_fallthru
      _
    // Predicated region
    $region26: #{tpu_custom_call.1} parent=1 // pred_check
      _
    $region27: #{tpu_custom_call.1} parent=1 // pred_check_branch
      %66 = sbr.rel (0) target = $region29
    $region28: #{tpu_custom_call.1} parent=1 // pred_region
      %67 = dma.done [#allocation6], 4096
    $region29: #{tpu_custom_call.1} parent=1 // pred_fallthru
      _
    // Predicated region
    $region30: #{tpu_custom_call.1} parent=1 // pred_check
      _
    $region31: #{tpu_custom_call.1} parent=1 // pred_check_branch
      %69 = sbr.rel (0) target = $region33
    $region32: #{tpu_custom_call.1} parent=1 // pred_region
      %70 = dma.done [#allocation6], 64
    $region33: #{tpu_custom_call.1} parent=1 // pred_fallthru
      _
    // Predicated region
    $region34: #{tpu_custom_call.1} parent=1 // pred_check
      _
    $region35: #{tpu_custom_call.1} parent=1 // pred_check_branch
      %72 = sbr.rel (0) target = $region37
    $region36: #{tpu_custom_call.1} parent=1 // pred_region
      %73 = dma.done [#allocation9], 4096
    $region37: #{tpu_custom_call.1} parent=1 // pred_fallthru
      _
    %v75 = vld [vmem:[#allocation2] sm:$0xff]
    %v76 = vld [vmem:[#allocation2 + $0x8] sm:$0xff]
    %v77 = vpack.c.bf16 %v76, %v75
    %v78 = vld [vmem:[#allocation5] sm:$0xff]
    %v79 = vld [vmem:[#allocation5 + $0x8] sm:$0xff]
    %v80 = vld [vmem:[#allocation5 + $0x10] sm:$0xff]
    %v81 = vld [vmem:[#allocation5 + $0x18] sm:$0xff]
    %v82 = vld [vmem:[#allocation5 + $0x20] sm:$0xff]
    %v83 = vld [vmem:[#allocation5 + $0x28] sm:$0xff]
    %v84 = vld [vmem:[#allocation5 + $0x30] sm:$0xff]
    %v85 = vld [vmem:[#allocation5 + $0x38] sm:$0xff]
    %v86 = vld [vmem:[#allocation5 + $0x40] sm:$0xff]
    %v87 = vld [vmem:[#allocation5 + $0x48] sm:$0xff]
    %v88 = vld [vmem:[#allocation5 + $0x50] sm:$0xff]
    %v89 = vld [vmem:[#allocation5 + $0x58] sm:$0xff]
    %v90 = vld [vmem:[#allocation5 + $0x60] sm:$0xff]
    %v91 = vld [vmem:[#allocation5 + $0x68] sm:$0xff]
    %v92 = vld [vmem:[#allocation5 + $0x70] sm:$0xff]
    %v93 = vld [vmem:[#allocation5 + $0x78] sm:$0xff]
    %v94 = vld [vmem:[#allocation5 + $0x80] sm:$0xff]
    %v95 = vld [vmem:[#allocation5 + $0x88] sm:$0xff]
    %v96 = vld [vmem:[#allocation5 + $0x90] sm:$0xff]
    %v97 = vld [vmem:[#allocation5 + $0x98] sm:$0xff]
    %v98 = vld [vmem:[#allocation5 + $0xa0] sm:$0xff]
    %v99 = vld [vmem:[#allocation5 + $0xa8] sm:$0xff]
    %v100 = vld [vmem:[#allocation5 + $0xb0] sm:$0xff]
    %v101 = vld [vmem:[#allocation5 + $0xb8] sm:$0xff]
    %v102 = vld [vmem:[#allocation5 + $0xc0] sm:$0xff]
    %v103 = vld [vmem:[#allocation5 + $0xc8] sm:$0xff]
    %v104 = vld [vmem:[#allocation5 + $0xd0] sm:$0xff]
    %v105 = vld [vmem:[#allocation5 + $0xd8] sm:$0xff]
    %v106 = vld [vmem:[#allocation5 + $0xe0] sm:$0xff]
    %v107 = vld [vmem:[#allocation5 + $0xe8] sm:$0xff]
    %v108 = vld [vmem:[#allocation5 + $0xf0] sm:$0xff]
    %v109 = vld [vmem:[#allocation5 + $0xf8] sm:$0xff]
    %v110 = vld [vmem:[#allocation7] sm:$0xf]
    %v112 = vlaneseq
    %v113 = vshrl.u32 %v112, 7
    %v114 = vsub.s32 0, %v113
    %v115 = vrot.slane %v110, %v114
    %v116 = vlaneseq
    %v117 = vshrl.u32 %v116, 7
    %v118 = vsub.s32 1, %v117
    %v119 = vrot.slane %v110, %v118
    %v120 = vlaneseq
    %v121 = vshrl.u32 %v120, 7
    %v122 = vsub.s32 2, %v121
    %v123 = vrot.slane %v110, %v122
    %v124 = vlaneseq
    %v125 = vshrl.u32 %v124, 7
    %v126 = vsub.s32 3, %v125
    %v127 = vrot.slane %v110, %v126
    %v164 = vunpack.c.l.b16 %v78
    %v165 = vunpack.c.h.b16 %v78
    %v166 = vunpack.c.l.b16 %v79
    %v167 = vunpack.c.h.b16 %v79
    %v168 = vunpack.c.l.b16 %v80
    %v169 = vunpack.c.h.b16 %v80
    %v170 = vunpack.c.l.b16 %v81
    %v171 = vunpack.c.h.b16 %v81
    %v172 = vunpack.c.l.b16 %v82
    %v173 = vunpack.c.h.b16 %v82
    %v174 = vunpack.c.l.b16 %v83
    %v175 = vunpack.c.h.b16 %v83
    %v176 = vunpack.c.l.b16 %v84
    %v177 = vunpack.c.h.b16 %v84
    %v178 = vunpack.c.l.b16 %v85
    %v179 = vunpack.c.h.b16 %v85
    %v180 = vunpack.c.l.b16 %v86
    %v181 = vunpack.c.h.b16 %v86
    %v182 = vunpack.c.l.b16 %v87
    %v183 = vunpack.c.h.b16 %v87
    %v184 = vunpack.c.l.b16 %v88
    %v185 = vunpack.c.h.b16 %v88
    %v186 = vunpack.c.l.b16 %v89
    %v187 = vunpack.c.h.b16 %v89
    %v188 = vunpack.c.l.b16 %v90
    %v189 = vunpack.c.h.b16 %v90
    %v190 = vunpack.c.l.b16 %v91
    %v191 = vunpack.c.h.b16 %v91
    %v192 = vunpack.c.l.b16 %v92
    %v193 = vunpack.c.h.b16 %v92
    %v194 = vunpack.c.l.b16 %v93
    %v195 = vunpack.c.h.b16 %v93
    %v196 = vunpack.c.l.b16 %v94
    %v197 = vunpack.c.h.b16 %v94
    %v198 = vunpack.c.l.b16 %v95
    %v199 = vunpack.c.h.b16 %v95
    %v200 = vunpack.c.l.b16 %v96
    %v201 = vunpack.c.h.b16 %v96
    %v202 = vunpack.c.l.b16 %v97
    %v203 = vunpack.c.h.b16 %v97
    %v204 = vunpack.c.l.b16 %v98
    %v205 = vunpack.c.h.b16 %v98
    %v206 = vunpack.c.l.b16 %v99
    %v207 = vunpack.c.h.b16 %v99
    %v208 = vunpack.c.l.b16 %v100
    %v209 = vunpack.c.h.b16 %v100
    %v210 = vunpack.c.l.b16 %v101
    %v211 = vunpack.c.h.b16 %v101
    %v212 = vunpack.c.l.b16 %v102
    %v213 = vunpack.c.h.b16 %v102
    %v214 = vunpack.c.l.b16 %v103
    %v215 = vunpack.c.h.b16 %v103
    %v216 = vunpack.c.l.b16 %v104
    %v217 = vunpack.c.h.b16 %v104
    %v218 = vunpack.c.l.b16 %v105
    %v219 = vunpack.c.h.b16 %v105
    %v220 = vunpack.c.l.b16 %v106
    %v221 = vunpack.c.h.b16 %v106
    %v222 = vunpack.c.l.b16 %v107
    %v223 = vunpack.c.h.b16 %v107
    %v224 = vunpack.c.l.b16 %v108
    %v225 = vunpack.c.h.b16 %v108
    %v226 = vunpack.c.l.b16 %v109
    %v227 = vunpack.c.h.b16 %v109
    %v228 = vpack.c.b16 %v168, %v164
    %v229 = vpack.c.b16 %v169, %v165
    %v230 = vpack.c.b16 %v170, %v166
    %v231 = vpack.c.b16 %v171, %v167
    %v232 = vpack.c.b16 %v176, %v172
    %v233 = vpack.c.b16 %v177, %v173
    %v234 = vpack.c.b16 %v178, %v174
    %v235 = vpack.c.b16 %v179, %v175
    %v236 = vpack.c.b16 %v184, %v180
    %v237 = vpack.c.b16 %v185, %v181
    %v238 = vpack.c.b16 %v186, %v182
    %v239 = vpack.c.b16 %v187, %v183
    %v240 = vpack.c.b16 %v192, %v188
    %v241 = vpack.c.b16 %v193, %v189
    %v242 = vpack.c.b16 %v194, %v190
    %v243 = vpack.c.b16 %v195, %v191
    %v244 = vpack.c.b16 %v200, %v196
    %v245 = vpack.c.b16 %v201, %v197
    %v246 = vpack.c.b16 %v202, %v198
    %v247 = vpack.c.b16 %v203, %v199
    %v248 = vpack.c.b16 %v208, %v204
    %v249 = vpack.c.b16 %v209, %v205
    %v250 = vpack.c.b16 %v210, %v206
    %v251 = vpack.c.b16 %v211, %v207
    %v252 = vpack.c.b16 %v216, %v212
    %v253 = vpack.c.b16 %v217, %v213
    %v254 = vpack.c.b16 %v218, %v214
    %v255 = vpack.c.b16 %v219, %v215
    %v256 = vpack.c.b16 %v224, %v220
    %v257 = vpack.c.b16 %v225, %v221
    %v258 = vpack.c.b16 %v226, %v222
    %v259 = vpack.c.b16 %v227, %v223
    %292 = vmatprep.subr.bf16.mxu0 %v257
    %293 = vmatpush1.bf16.msra.mxu0 %v256
    %294 = vmatprep.subr.bf16.mxu0 %v253
    %295 = vmatpush1.bf16.msra.mxu0 %v252
    %296 = vmatprep.subr.bf16.mxu0 %v249
    %297 = vmatpush1.bf16.msra.mxu0 %v248
    %298 = vmatprep.subr.bf16.mxu0 %v245
    %299 = vmatpush1.bf16.msra.mxu0 %v244
    %300 = vmatprep.subr.bf16.mxu0 %v241
    %301 = vmatpush1.bf16.msra.mxu0 %v240
    %302 = vmatprep.subr.bf16.mxu0 %v237
    %303 = vmatpush1.bf16.msra.mxu0 %v236
    %304 = vmatprep.subr.bf16.mxu0 %v233
    %305 = vmatpush1.bf16.msra.mxu0 %v232
    %306 = vmatprep.subr.bf16.mxu0 %v229
    %307 = vmatpush1.bf16.msra.mxu0 %v228
    %308 = vmatprep.subr.bf16.mxu0 0
    %309 = vmatpush2.bf16.msra.mxu0 0
    %310 = vmatprep.subr.bf16.mxu0 0
    %311 = vmatpush2.bf16.msra.mxu0 0
    %312 = vmatprep.subr.bf16.mxu0 0
    %313 = vmatpush2.bf16.msra.mxu0 0
    %314 = vmatprep.subr.bf16.mxu0 0
    %315 = vmatpush2.bf16.msra.mxu0 0
    %316 = vmatprep.subr.bf16.mxu0 0
    %317 = vmatpush2.bf16.msra.mxu0 0
    %318 = vmatprep.subr.bf16.mxu0 0
    %319 = vmatpush2.bf16.msra.mxu0 0
    %320 = vmatprep.subr.bf16.mxu0 0
    %321 = vmatpush2.bf16.msra.mxu0 0
    %322 = vmatprep.subr.bf16.mxu0 0
    %323 = vmatpush2.bf16.msra.mxu0 0
    %324 = vmatprep.mubr.bf16.mxu0 0
    %325 = vmatmul.mubr.bf16.gmra.mxu0 %v77
    %v326 = vpop.f32.mrf.mxu0
    %v327 = vadd.f32 %v115, %v326
    %v328 = vpop.f32.mrf.mxu0
    %v329 = vadd.f32 %v119, %v328
    %v330 = vpop.f32.mrf.mxu0
    %v331 = vadd.f32 %v115, %v330
    %v332 = vpop.f32.mrf.mxu0
    %v333 = vadd.f32 %v119, %v332
    %334 = vdwg.mxu0
    %335 = vmatprep.subr.bf16.mxu0 %v259
    %336 = vmatpush1.bf16.msra.mxu0 %v258
    %337 = vmatprep.subr.bf16.mxu0 %v255
    %338 = vmatpush1.bf16.msra.mxu0 %v254
    %339 = vmatprep.subr.bf16.mxu0 %v251
    %340 = vmatpush1.bf16.msra.mxu0 %v250
    %341 = vmatprep.subr.bf16.mxu0 %v247
    %342 = vmatpush1.bf16.msra.mxu0 %v246
    %343 = vmatprep.subr.bf16.mxu0 %v243
    %344 = vmatpush1.bf16.msra.mxu0 %v242
    %345 = vmatprep.subr.bf16.mxu0 %v239
    %346 = vmatpush1.bf16.msra.mxu0 %v238
    %347 = vmatprep.subr.bf16.mxu0 %v235
    %348 = vmatpush1.bf16.msra.mxu0 %v234
    %349 = vmatprep.subr.bf16.mxu0 %v231
    %350 = vmatpush1.bf16.msra.mxu0 %v230
    %351 = vmatprep.subr.bf16.mxu0 0
    %352 = vmatpush2.bf16.msra.mxu0 0
    %353 = vmatprep.subr.bf16.mxu0 0
    %354 = vmatpush2.bf16.msra.mxu0 0
    %355 = vmatprep.subr.bf16.mxu0 0
    %356 = vmatpush2.bf16.msra.mxu0 0
    %357 = vmatprep.subr.bf16.mxu0 0
    %358 = vmatpush2.bf16.msra.mxu0 0
    %359 = vmatprep.subr.bf16.mxu0 0
    %360 = vmatpush2.bf16.msra.mxu0 0
    %361 = vmatprep.subr.bf16.mxu0 0
    %362 = vmatpush2.bf16.msra.mxu0 0
    %363 = vmatprep.subr.bf16.mxu0 0
    %364 = vmatpush2.bf16.msra.mxu0 0
    %365 = vmatprep.subr.bf16.mxu0 0
    %366 = vmatpush2.bf16.msra.mxu0 0
    %367 = vmatprep.mubr.bf16.mxu0 0
    %368 = vmatmul.mubr.bf16.gmra.mxu0 %v77
    %v369 = vpop.f32.mrf.mxu0
    %v370 = vadd.f32 %v123, %v369
    %v371 = vpop.f32.mrf.mxu0
    %v372 = vadd.f32 %v127, %v371
    %v373 = vpop.f32.mrf.mxu0
    %v374 = vadd.f32 %v123, %v373
    %v375 = vpop.f32.mrf.mxu0
    %v376 = vadd.f32 %v127, %v375
    %377 = vdwg.mxu0
    %v378 = vmul.f32 %v327, %v327
    %v379 = vmul.f32 %v329, %v329
    %v380 = vmul.f32 %v370, %v370
    %v381 = vmul.f32 %v372, %v372
    %v382 = vmul.f32 %v331, %v331
    %v383 = vmul.f32 %v333, %v333
    %v384 = vmul.f32 %v374, %v374
    %v385 = vmul.f32 %v376, %v376
    %v386 = vmul.f32 %v378, 0.035677407
    %v387 = vmul.f32 %v379, 0.035677407
    %v388 = vmul.f32 %v380, 0.035677407
    %v389 = vmul.f32 %v381, 0.035677407
    %v390 = vmul.f32 %v382, 0.035677407
    %v391 = vmul.f32 %v383, 0.035677407
    %v392 = vmul.f32 %v384, 0.035677407
    %v393 = vmul.f32 %v385, 0.035677407
    %v394 = vadd.f32 %v386, 0.7978846
    %v395 = vadd.f32 %v387, 0.7978846
    %v396 = vadd.f32 %v388, 0.7978846
    %v397 = vadd.f32 %v389, 0.7978846
    %v398 = vadd.f32 %v390, 0.7978846
    %v399 = vadd.f32 %v391, 0.7978846
    %v400 = vadd.f32 %v392, 0.7978846
    %v401 = vadd.f32 %v393, 0.7978846
    %v402 = vmul.f32 %v327, %v394
    %v403 = vmul.f32 %v329, %v395
    %v404 = vmul.f32 %v370, %v396
    %v405 = vmul.f32 %v372, %v397
    %v406 = vmul.f32 %v331, %v398
    %v407 = vmul.f32 %v333, %v399
    %v408 = vmul.f32 %v374, %v400
    %v409 = vmul.f32 %v376, %v401
    %v410 = vmul.f32 %v327, 0.5
    %v411 = vmul.f32 %v329, 0.5
    %v412 = vmul.f32 %v370, 0.5
    %v413 = vmul.f32 %v372, 0.5
    %v414 = vmul.f32 %v331, 0.5
    %v415 = vmul.f32 %v333, 0.5
    %v416 = vmul.f32 %v374, 0.5
    %v417 = vmul.f32 %v376, 0.5
    %v418 = vtanh.pop %v402
    %v419 = vtanh.pop %v403
    %v420 = vtanh.pop %v404
    %v421 = vtanh.pop %v405
    %v422 = vtanh.pop %v406
    %v423 = vtanh.pop %v407
    %v424 = vtanh.pop %v408
    %v425 = vtanh.pop %v409
    %v426 = vadd.f32 %v418, 1.0
    %v427 = vadd.f32 %v419, 1.0
    %v428 = vadd.f32 %v420, 1.0
    %v429 = vadd.f32 %v421, 1.0
    %v430 = vadd.f32 %v422, 1.0
    %v431 = vadd.f32 %v423, 1.0
    %v432 = vadd.f32 %v424, 1.0
    %v433 = vadd.f32 %v425, 1.0
    %v434 = vmul.f32 %v410, %v426
    %v435 = vmul.f32 %v411, %v427
    %v436 = vmul.f32 %v412, %v428
    %v437 = vmul.f32 %v413, %v429
    %v438 = vmul.f32 %v414, %v430
    %v439 = vmul.f32 %v415, %v431
    %v440 = vmul.f32 %v416, %v432
    %v441 = vmul.f32 %v417, %v433
    %v442 = vpack.c.bf16 %v438, %v434
    %v443 = vpack.c.bf16 %v439, %v435
    %v444 = vpack.c.bf16 %v440, %v436
    %v445 = vpack.c.bf16 %v441, %v437
    %v446 = vld [vmem:[#allocation8] sm:$0xf]
    %v447 = vld [vmem:[#allocation8 + $0x4] sm:$0xf]
    %v448 = vld [vmem:[#allocation8 + $0x8] sm:$0xf]
    %v449 = vld [vmem:[#allocation8 + $0xc] sm:$0xf]
    %v450 = vld [vmem:[#allocation8 + $0x10] sm:$0xf]
    %v451 = vld [vmem:[#allocation8 + $0x14] sm:$0xf]
    %v452 = vld [vmem:[#allocation8 + $0x18] sm:$0xf]
    %v453 = vld [vmem:[#allocation8 + $0x1c] sm:$0xf]
    %v454 = vld [vmem:[#allocation8 + $0x20] sm:$0xf]
    %v455 = vld [vmem:[#allocation8 + $0x24] sm:$0xf]
    %v456 = vld [vmem:[#allocation8 + $0x28] sm:$0xf]
    %v457 = vld [vmem:[#allocation8 + $0x2c] sm:$0xf]
    %v458 = vld [vmem:[#allocation8 + $0x30] sm:$0xf]
    %v459 = vld [vmem:[#allocation8 + $0x34] sm:$0xf]
    %v460 = vld [vmem:[#allocation8 + $0x38] sm:$0xf]
    %v461 = vld [vmem:[#allocation8 + $0x3c] sm:$0xf]
    %v462 = vld [vmem:[#allocation8 + $0x40] sm:$0xf]
    %v463 = vld [vmem:[#allocation8 + $0x44] sm:$0xf]
    %v464 = vld [vmem:[#allocation8 + $0x48] sm:$0xf]
    %v465 = vld [vmem:[#allocation8 + $0x4c] sm:$0xf]
    %v466 = vld [vmem:[#allocation8 + $0x50] sm:$0xf]
    %v467 = vld [vmem:[#allocation8 + $0x54] sm:$0xf]
    %v468 = vld [vmem:[#allocation8 + $0x58] sm:$0xf]
    %v469 = vld [vmem:[#allocation8 + $0x5c] sm:$0xf]
    %v470 = vld [vmem:[#allocation8 + $0x60] sm:$0xf]
    %v471 = vld [vmem:[#allocation8 + $0x64] sm:$0xf]
    %v472 = vld [vmem:[#allocation8 + $0x68] sm:$0xf]
    %v473 = vld [vmem:[#allocation8 + $0x6c] sm:$0xf]
    %v474 = vld [vmem:[#allocation8 + $0x70] sm:$0xf]
    %v475 = vld [vmem:[#allocation8 + $0x74] sm:$0xf]
    %v476 = vld [vmem:[#allocation8 + $0x78] sm:$0xf]
    %v477 = vld [vmem:[#allocation8 + $0x7c] sm:$0xf]
    %v478 = vld [vmem:[#allocation8 + $0x80] sm:$0xf]
    %v479 = vld [vmem:[#allocation8 + $0x84] sm:$0xf]
    %v480 = vld [vmem:[#allocation8 + $0x88] sm:$0xf]
    %v481 = vld [vmem:[#allocation8 + $0x8c] sm:$0xf]
    %v482 = vld [vmem:[#allocation8 + $0x90] sm:$0xf]
    %v483 = vld [vmem:[#allocation8 + $0x94] sm:$0xf]
    %v484 = vld [vmem:[#allocation8 + $0x98] sm:$0xf]
    %v485 = vld [vmem:[#allocation8 + $0x9c] sm:$0xf]
    %v486 = vld [vmem:[#allocation8 + $0xa0] sm:$0xf]
    %v487 = vld [vmem:[#allocation8 + $0xa4] sm:$0xf]
    %v488 = vld [vmem:[#allocation8 + $0xa8] sm:$0xf]
    %v489 = vld [vmem:[#allocation8 + $0xac] sm:$0xf]
    %v490 = vld [vmem:[#allocation8 + $0xb0] sm:$0xf]
    %v491 = vld [vmem:[#allocation8 + $0xb4] sm:$0xf]
    %v492 = vld [vmem:[#allocation8 + $0xb8] sm:$0xf]
    %v493 = vld [vmem:[#allocation8 + $0xbc] sm:$0xf]
    %v494 = vld [vmem:[#allocation8 + $0xc0] sm:$0xf]
    %v495 = vld [vmem:[#allocation8 + $0xc4] sm:$0xf]
    %v496 = vld [vmem:[#allocation8 + $0xc8] sm:$0xf]
    %v497 = vld [vmem:[#allocation8 + $0xcc] sm:$0xf]
    %v498 = vld [vmem:[#allocation8 + $0xd0] sm:$0xf]
    %v499 = vld [vmem:[#allocation8 + $0xd4] sm:$0xf]
    %v500 = vld [vmem:[#allocation8 + $0xd8] sm:$0xf]
    %v501 = vld [vmem:[#allocation8 + $0xdc] sm:$0xf]
    %v502 = vld [vmem:[#allocation8 + $0xe0] sm:$0xf]
    %v503 = vld [vmem:[#allocation8 + $0xe4] sm:$0xf]
    %v504 = vld [vmem:[#allocation8 + $0xe8] sm:$0xf]
    %v505 = vld [vmem:[#allocation8 + $0xec] sm:$0xf]
    %v506 = vld [vmem:[#allocation8 + $0xf0] sm:$0xf]
    %v507 = vld [vmem:[#allocation8 + $0xf4] sm:$0xf]
    %v508 = vld [vmem:[#allocation8 + $0xf8] sm:$0xf]
    %v509 = vld [vmem:[#allocation8 + $0xfc] sm:$0xf]
    %v510 = vld [vmem:[%s4] sm:$0x1]
    %v512 = vlaneseq
    %v513 = vshrl.u32 %v512, 7
    %v514 = vsub.s32 0, %v513
    %v515 = vrot.slane %v510, %v514
    %v581 = vunpack.c.l.b16 %v446
    %v582 = vunpack.c.l.b16 %v447
    %v583 = vunpack.c.l.b16 %v448
    %v584 = vunpack.c.l.b16 %v449
    %v585 = vunpack.c.l.b16 %v450
    %v586 = vunpack.c.l.b16 %v451
    %v587 = vunpack.c.l.b16 %v452
    %v588 = vunpack.c.l.b16 %v453
    %v589 = vunpack.c.l.b16 %v454
    %v590 = vunpack.c.l.b16 %v455
    %v591 = vunpack.c.l.b16 %v456
    %v592 = vunpack.c.l.b16 %v457
    %v593 = vunpack.c.l.b16 %v458
    %v594 = vunpack.c.l.b16 %v459
    %v595 = vunpack.c.l.b16 %v460
    %v596 = vunpack.c.l.b16 %v461
    %v597 = vunpack.c.l.b16 %v462
    %v598 = vunpack.c.l.b16 %v463
    %v599 = vunpack.c.l.b16 %v464
    %v600 = vunpack.c.l.b16 %v465
    %v601 = vunpack.c.l.b16 %v466
    %v602 = vunpack.c.l.b16 %v467
    %v603 = vunpack.c.l.b16 %v468
    %v604 = vunpack.c.l.b16 %v469
    %v605 = vunpack.c.l.b16 %v470
    %v606 = vunpack.c.l.b16 %v471
    %v607 = vunpack.c.l.b16 %v472
    %v608 = vunpack.c.l.b16 %v473
    %v609 = vunpack.c.l.b16 %v474
    %v610 = vunpack.c.l.b16 %v475
    %v611 = vunpack.c.l.b16 %v476
    %v612 = vunpack.c.l.b16 %v477
    %v613 = vunpack.c.l.b16 %v478
    %v614 = vunpack.c.l.b16 %v479
    %v615 = vunpack.c.l.b16 %v480
    %v616 = vunpack.c.l.b16 %v481
    %v617 = vunpack.c.l.b16 %v482
    %v618 = vunpack.c.l.b16 %v483
    %v619 = vunpack.c.l.b16 %v484
    %v620 = vunpack.c.l.b16 %v485
    %v621 = vunpack.c.l.b16 %v486
    %v622 = vunpack.c.l.b16 %v487
    %v623 = vunpack.c.l.b16 %v488
    %v624 = vunpack.c.l.b16 %v489
    %v625 = vunpack.c.l.b16 %v490
    %v626 = vunpack.c.l.b16 %v491
    %v627 = vunpack.c.l.b16 %v492
    %v628 = vunpack.c.l.b16 %v493
    %v629 = vunpack.c.l.b16 %v494
    %v630 = vunpack.c.l.b16 %v495
    %v631 = vunpack.c.l.b16 %v496
    %v632 = vunpack.c.l.b16 %v497
    %v633 = vunpack.c.l.b16 %v498
    %v634 = vunpack.c.l.b16 %v499
    %v635 = vunpack.c.l.b16 %v500
    %v636 = vunpack.c.l.b16 %v501
    %v637 = vunpack.c.l.b16 %v502
    %v638 = vunpack.c.l.b16 %v503
    %v639 = vunpack.c.l.b16 %v504
    %v640 = vunpack.c.l.b16 %v505
    %v641 = vunpack.c.l.b16 %v506
    %v642 = vunpack.c.l.b16 %v507
    %v643 = vunpack.c.l.b16 %v508
    %v644 = vunpack.c.l.b16 %v509
    %v645 = vpack.c.b16 %v582, %v581
    %v646 = vpack.c.b16 %v584, %v583
    %v647 = vpack.c.b16 %v586, %v585
    %v648 = vpack.c.b16 %v588, %v587
    %v649 = vpack.c.b16 %v590, %v589
    %v650 = vpack.c.b16 %v592, %v591
    %v651 = vpack.c.b16 %v594, %v593
    %v652 = vpack.c.b16 %v596, %v595
    %v653 = vpack.c.b16 %v598, %v597
    %v654 = vpack.c.b16 %v600, %v599
    %v655 = vpack.c.b16 %v602, %v601
    %v656 = vpack.c.b16 %v604, %v603
    %v657 = vpack.c.b16 %v606, %v605
    %v658 = vpack.c.b16 %v608, %v607
    %v659 = vpack.c.b16 %v610, %v609
    %v660 = vpack.c.b16 %v612, %v611
    %v661 = vpack.c.b16 %v614, %v613
    %v662 = vpack.c.b16 %v616, %v615
    %v663 = vpack.c.b16 %v618, %v617
    %v664 = vpack.c.b16 %v620, %v619
    %v665 = vpack.c.b16 %v622, %v621
    %v666 = vpack.c.b16 %v624, %v623
    %v667 = vpack.c.b16 %v626, %v625
    %v668 = vpack.c.b16 %v628, %v627
    %v669 = vpack.c.b16 %v630, %v629
    %v670 = vpack.c.b16 %v632, %v631
    %v671 = vpack.c.b16 %v634, %v633
    %v672 = vpack.c.b16 %v636, %v635
    %v673 = vpack.c.b16 %v638, %v637
    %v674 = vpack.c.b16 %v640, %v639
    %v675 = vpack.c.b16 %v642, %v641
    %v676 = vpack.c.b16 %v644, %v643
    %709 = vmatprep.subr.bf16.mxu0 0
    %710 = vmatpush1.bf16.msra.mxu0 %v652
    %711 = vmatprep.subr.bf16.mxu0 0
    %712 = vmatpush1.bf16.msra.mxu0 %v651
    %713 = vmatprep.subr.bf16.mxu0 0
    %714 = vmatpush1.bf16.msra.mxu0 %v650
    %715 = vmatprep.subr.bf16.mxu0 0
    %716 = vmatpush1.bf16.msra.mxu0 %v649
    %717 = vmatprep.subr.bf16.mxu0 0
    %718 = vmatpush1.bf16.msra.mxu0 %v648
    %719 = vmatprep.subr.bf16.mxu0 0
    %720 = vmatpush1.bf16.msra.mxu0 %v647
    %721 = vmatprep.subr.bf16.mxu0 0
    %722 = vmatpush1.bf16.msra.mxu0 %v646
    %723 = vmatprep.subr.bf16.mxu0 0
    %724 = vmatpush1.bf16.msra.mxu0 %v645
    %725 = vmatprep.subr.bf16.mxu0 0
    %726 = vmatpush2.bf16.msra.mxu0 %v660
    %727 = vmatprep.subr.bf16.mxu0 0
    %728 = vmatpush2.bf16.msra.mxu0 %v659
    %729 = vmatprep.subr.bf16.mxu0 0
    %730 = vmatpush2.bf16.msra.mxu0 %v658
    %731 = vmatprep.subr.bf16.mxu0 0
    %732 = vmatpush2.bf16.msra.mxu0 %v657
    %733 = vmatprep.subr.bf16.mxu0 0
    %734 = vmatpush2.bf16.msra.mxu0 %v656
    %735 = vmatprep.subr.bf16.mxu0 0
    %736 = vmatpush2.bf16.msra.mxu0 %v655
    %737 = vmatprep.subr.bf16.mxu0 0
    %738 = vmatpush2.bf16.msra.mxu0 %v654
    %739 = vmatprep.subr.bf16.mxu0 0
    %740 = vmatpush2.bf16.msra.mxu0 %v653
    %741 = vmatprep.mubr.bf16.mxu0 %v443
    %742 = vmatmul.mubr.bf16.gmra.mxu0 %v442
    %v743 = vpop.f32.mrf.mxu0
    %v744 = vadd.f32 %v515, %v743
    %v745 = vpop.f32.mrf.mxu0
    %v746 = vpop.f32.mrf.mxu0
    %v747 = vadd.f32 %v515, %v746
    %v748 = vpop.f32.mrf.mxu0
    %749 = vdwg.mxu0
    %750 = vmatprep.subr.bf16.mxu0 0
    %751 = vmatpush1.bf16.msra.mxu0 %v668
    %752 = vmatprep.subr.bf16.mxu0 0
    %753 = vmatpush1.bf16.msra.mxu0 %v667
    %754 = vmatprep.subr.bf16.mxu0 0
    %755 = vmatpush1.bf16.msra.mxu0 %v666
    %756 = vmatprep.subr.bf16.mxu0 0
    %757 = vmatpush1.bf16.msra.mxu0 %v665
    %758 = vmatprep.subr.bf16.mxu0 0
    %759 = vmatpush1.bf16.msra.mxu0 %v664
    %760 = vmatprep.subr.bf16.mxu0 0
    %761 = vmatpush1.bf16.msra.mxu0 %v663
    %762 = vmatprep.subr.bf16.mxu0 0
    %763 = vmatpush1.bf16.msra.mxu0 %v662
    %764 = vmatprep.subr.bf16.mxu0 0
    %765 = vmatpush1.bf16.msra.mxu0 %v661
    %766 = vmatprep.subr.bf16.mxu0 0
    %767 = vmatpush2.bf16.msra.mxu0 %v676
    %768 = vmatprep.subr.bf16.mxu0 0
    %769 = vmatpush2.bf16.msra.mxu0 %v675
    %770 = vmatprep.subr.bf16.mxu0 0
    %771 = vmatpush2.bf16.msra.mxu0 %v674
    %772 = vmatprep.subr.bf16.mxu0 0
    %773 = vmatpush2.bf16.msra.mxu0 %v673
    %774 = vmatprep.subr.bf16.mxu0 0
    %775 = vmatpush2.bf16.msra.mxu0 %v672
    %776 = vmatprep.subr.bf16.mxu0 0
    %777 = vmatpush2.bf16.msra.mxu0 %v671
    %778 = vmatprep.subr.bf16.mxu0 0
    %779 = vmatpush2.bf16.msra.mxu0 %v670
    %780 = vmatprep.subr.bf16.mxu0 0
    %781 = vmatpush2.bf16.msra.mxu0 %v669
    %782 = vmatprep.mubr.bf16.mxu0 %v445
    %783 = vmatmul.mubr.bf16.gmra.mxu0 %v444
    %v784 = vpop.f32.mrf.mxu0
    %v785 = vadd.f32 %v744, %v784
    %v786 = vpop.f32.mrf.mxu0
    %v787 = vpop.f32.mrf.mxu0
    %v788 = vadd.f32 %v747, %v787
    %v789 = vpop.f32.mrf.mxu0
    %790 = vdwg.mxu0
    %791 = vst [vmem:[#allocation10] sm:$0xff] %v785
    %792 = vst [vmem:[#allocation10 + $0x8] sm:$0xff] %v788
    // Predicated region
    $region38: #{tpu_custom_call.1} parent=1 // pred_check
      _
    $region39: #{tpu_custom_call.1} parent=1 // pred_check_branch
      %794 = sbr.rel (0) target = $region41
    $region40: #{tpu_custom_call.1} parent=1 // pred_region
      %s796 = ssub.s32 256, 256
      %797 = vsyncadd [#allocation4], %s796
      %s798 = sshll.u32 [#allocation10], 4
      %s799 = int_to_ptr.vmem [resolvable:$true] %s798
      %804 = dma.vmem_to_hbm [thread:$0]  %s799, 256, %s5, [#allocation4], 128, 128, 8
    $region41: #{tpu_custom_call.1} parent=1 // pred_fallthru
      _
    // Predicated region
    $region42: #{tpu_custom_call.1} parent=1 // pred_check
      _
    $region43: #{tpu_custom_call.1} parent=1 // pred_check_branch
      %806 = sbr.rel (0) target = $region45
    $region44: #{tpu_custom_call.1} parent=1 // pred_region
      %807 = dma.done [#allocation4], 256
    $region45: #{tpu_custom_call.1} parent=1 // pred_fallthru
      _
    %808 = vsyncpa [#allocation3], 1
    %809 = vsyncpa [#allocation6], 1
    %810 = vsyncpa [#allocation9], 1
    %811 = vsyncpa [#allocation4], 1

// kernel: tpu_custom_call.1
$region0: #{tpu_custom_call.1}
  #allocation0 [shape = 'u32[]', space=smem, size = 0x4, offset = 0x4, fixed_abs, tag = 'smem constant byte address 0x4 - core index']
  #allocation1 [shape = 'u32[144,128]{1,0:T(1,128)}', space=vmem, size = 0x12000, scoped, tag = 'internal scratch']
  %s0 = inlined_call_operand.hbm [shape: f32[16,128], index: 0, kind: input, shape index: {}]
  %s1 = inlined_call_operand.hbm [shape: bf16[128,512], index: 1, kind: input, shape index: {}]
  %s2 = inlined_call_operand.hbm [shape: f32[1,512], index: 2, kind: input, shape index: {}]
  %s3 = inlined_call_operand.hbm [shape: bf16[512,128], index: 3, kind: input, shape index: {}]
  %s4 = inlined_call_operand.vmem [shape: f32[1,128], index: 4, kind: input, shape index: {}]
  %s5 = inlined_call_operand.hbm [shape: f32[16,128], index: 5, kind: output, shape index: {}]
  %s6 = sld [smem:[#allocation0]]
  $region46: #{tpu_custom_call.1} parent=0
    _
  %s8 = ssub.s32 1, %s6
  %s9 = scalar_select 0, %s8, %s6
  $region1: #{tpu_custom_call.1} parent=0
    #allocation2 [shape = 'u8[8192]{0}', space=vmem, size = 0x2000, scoped, tag = 'input window, operand 0, single buffered']
    #allocation3 [shape = 's32[1]{0}', space=sflag, size = 0x4, scoped, tag = 'scoped memory for tpu_custom_call.1']
    #allocation4 [shape = 's32[1]{0}', space=sflag, size = 0x4, scoped, tag = 'scoped memory for tpu_custom_call.1']
    #allocation5 [shape = 'u8[131072]{0}', space=vmem, size = 0x20000, scoped, tag = 'input window, operand 1, single buffered']
    #allocation6 [shape = 's32[1]{0}', space=sflag, size = 0x4, scoped, tag = 'scoped memory for tpu_custom_call.1']
    #allocation7 [shape = 'u8[2048]{0}', space=vmem, size = 0x800, scoped, tag = 'input window, operand 2, single buffered']
    #allocation8 [shape = 'u8[131072]{0}', space=vmem, size = 0x20000, scoped, tag = 'input window, operand 3, single buffered']
    #allocation9 [shape = 's32[1]{0}', space=sflag, size = 0x4, scoped, tag = 'scoped memory for tpu_custom_call.1']
    #allocation10 [shape = 'u8[8192]{0}', space=vmem, size = 0x2000, scoped, tag = 'output window, operand 0, single buffered']
    %10 = vsyncpa [#allocation3], 0
    %11 = vsyncpa [#allocation6], 0
    %12 = vsyncpa [#allocation9], 0
    %13 = vsyncpa [#allocation4], 0
    // Predicated region
    $region2: #{tpu_custom_call.1} parent=1 // pred_check
      _
    $region3: #{tpu_custom_call.1} parent=1 // pred_check_branch
      %15 = sbr.rel (0) target = $region5
    $region4: #{tpu_custom_call.1} parent=1 // pred_region
      %s17 = ssub.s32 256, 256
      %18 = vsyncadd [#allocation3], %s17
      %s19 = sshll.u32 [#allocation2], 4
      %s20 = int_to_ptr.vmem [resolvable:$true] %s19
      %25 = dma.hbm_to_vmem [thread:$0]  %s0, 256, %s20, [#allocation3], 128, 128, 8
    $region5: #{tpu_custom_call.1} parent=1 // pred_fallthru
      _
    // Predicated region
    $region6: #{tpu_custom_call.1} parent=1 // pred_check
      _
    $region7: #{tpu_custom_call.1} parent=1 // pred_check_branch
      %27 = sbr.rel (0) target = $region9
    $region8: #{tpu_custom_call.1} parent=1 // pred_region
      %s29 = ssub.s32 4096, 4096
      %30 = vsyncadd [#allocation6], %s29
      %s31 = sshll.u32 [#allocation5], 4
      %s32 = int_to_ptr.vmem [resolvable:$true] %s31
      %37 = dma.hbm_to_vmem [thread:$0]  %s1, 4096, %s32, [#allocation6], 256, 256, 16
    $region9: #{tpu_custom_call.1} parent=1 // pred_fallthru
      _
    // Predicated region
    $region10: #{tpu_custom_call.1} parent=1 // pred_check
      _
    $region11: #{tpu_custom_call.1} parent=1 // pred_check_branch
      %39 = sbr.rel (0) target = $region13
    $region12: #{tpu_custom_call.1} parent=1 // pred_region
      %s41 = ssub.s32 64, 64
      %42 = vsyncadd [#allocation6], %s41
      %s44 = sshll.u32 [#allocation7], 4
      %s45 = int_to_ptr.vmem [resolvable:$true] %s44
      %47 = dma.hbm_to_vmem [thread:$0]  %s2, 64, %s45, [#allocation6]
    $region13: #{tpu_custom_call.1} parent=1 // pred_fallthru
      _
    // Predicated region
    $region14: #{tpu_custom_call.1} parent=1 // pred_check
      _
    $region15: #{tpu_custom_call.1} parent=1 // pred_check_branch
      %49 = sbr.rel (0) target = $region17
    $region16: #{tpu_custom_call.1} parent=1 // pred_region
      %s51 = ssub.s32 4096, 4096
      %52 = vsyncadd [#allocation9], %s51
      %s53 = sshll.u32 [#allocation8], 4
      %s54 = int_to_ptr.vmem [resolvable:$true] %s53
      %59 = dma.hbm_to_vmem [thread:$0]  %s3, 4096, %s54, [#allocation9], 64, 64, 4
    $region17: #{tpu_custom_call.1} parent=1 // pred_fallthru
      _
    // Predicated region
    $region18: #{tpu_custom_call.1} parent=1 // pred_check
      _
    $region19: #{tpu_custom_call.1} parent=1 // pred_check_branch
      %61 = sbr.rel (0) target = $region21
    $region20: #{tpu_custom_call.1} parent=1 // pred_region
      _
    $region21: #{tpu_custom_call.1} parent=1 // pred_fallthru
      _
    // Predicated region
    $region22: #{tpu_custom_call.1} parent=1 // pred_check
      _
    $region23: #{tpu_custom_call.1} parent=1 // pred_check_branch
      %63 = sbr.rel (0) target = $region25
    $region24: #{tpu_custom_call.1} parent=1 // pred_region
      %64 = dma.done [#allocation3], 256
    $region25: #{tpu_custom_call.1} parent=1 // pred_fallthru
      _
    // Predicated region
    $region26: #{tpu_custom_call.1} parent=1 // pred_check
      _
    $region27: #{tpu_custom_call.1} parent=1 // pred_check_branch
      %66 = sbr.rel (0) target = $region29
    $region28: #{tpu_custom_call.1} parent=1 // pred_region
      %67 = dma.done [#allocation6], 4096
    $region29: #{tpu_custom_call.1} parent=1 // pred_fallthru
      _
    // Predicated region
    $region30: #{tpu_custom_call.1} parent=1 // pred_check
      _
    $region31: #{tpu_custom_call.1} parent=1 // pred_check_branch
      %69 = sbr.rel (0) target = $region33
    $region32: #{tpu_custom_call.1} parent=1 // pred_region
      %70 = dma.done [#allocation6], 64
    $region33: #{tpu_custom_call.1} parent=1 // pred_fallthru
      _
    // Predicated region
    $region34: #{tpu_custom_call.1} parent=1 // pred_check
      _
    $region35: #{tpu_custom_call.1} parent=1 // pred_check_branch
      %72 = sbr.rel (0) target = $region37
    $region36: #{tpu_custom_call.1} parent=1 // pred_region
      %73 = dma.done [#allocation9], 4096
    $region37: #{tpu_custom_call.1} parent=1 // pred_fallthru
      _
    %v75 = vld [vmem:[#allocation2] sm:$0xff]
    %v76 = vld [vmem:[#allocation2 + $0x8] sm:$0xff]
    %v77 = vpack.c.bf16 %v76, %v75
    %v78 = vld [vmem:[#allocation5] sm:$0xff]
    %v79 = vld [vmem:[#allocation5 + $0x8] sm:$0xff]
    %v80 = vld [vmem:[#allocation5 + $0x10] sm:$0xff]
    %v81 = vld [vmem:[#allocation5 + $0x18] sm:$0xff]
    %v82 = vld [vmem:[#allocation5 + $0x20] sm:$0xff]
    %v83 = vld [vmem:[#allocation5 + $0x28] sm:$0xff]
    %v84 = vld [vmem:[#allocation5 + $0x30] sm:$0xff]
    %v85 = vld [vmem:[#allocation5 + $0x38] sm:$0xff]
    %v86 = vld [vmem:[#allocation5 + $0x40] sm:$0xff]
    %v87 = vld [vmem:[#allocation5 + $0x48] sm:$0xff]
    %v88 = vld [vmem:[#allocation5 + $0x50] sm:$0xff]
    %v89 = vld [vmem:[#allocation5 + $0x58] sm:$0xff]
    %v90 = vld [vmem:[#allocation5 + $0x60] sm:$0xff]
    %v91 = vld [vmem:[#allocation5 + $0x68] sm:$0xff]
    %v92 = vld [vmem:[#allocation5 + $0x70] sm:$0xff]
    %v93 = vld [vmem:[#allocation5 + $0x78] sm:$0xff]
    %v94 = vld [vmem:[#allocation5 + $0x80] sm:$0xff]
    %v95 = vld [vmem:[#allocation5 + $0x88] sm:$0xff]
    %v96 = vld [vmem:[#allocation5 + $0x90] sm:$0xff]
    %v97 = vld [vmem:[#allocation5 + $0x98] sm:$0xff]
    %v98 = vld [vmem:[#allocation5 + $0xa0] sm:$0xff]
    %v99 = vld [vmem:[#allocation5 + $0xa8] sm:$0xff]
    %v100 = vld [vmem:[#allocation5 + $0xb0] sm:$0xff]
    %v101 = vld [vmem:[#allocation5 + $0xb8] sm:$0xff]
    %v102 = vld [vmem:[#allocation5 + $0xc0] sm:$0xff]
    %v103 = vld [vmem:[#allocation5 + $0xc8] sm:$0xff]
    %v104 = vld [vmem:[#allocation5 + $0xd0] sm:$0xff]
    %v105 = vld [vmem:[#allocation5 + $0xd8] sm:$0xff]
    %v106 = vld [vmem:[#allocation5 + $0xe0] sm:$0xff]
    %v107 = vld [vmem:[#allocation5 + $0xe8] sm:$0xff]
    %v108 = vld [vmem:[#allocation5 + $0xf0] sm:$0xff]
    %v109 = vld [vmem:[#allocation5 + $0xf8] sm:$0xff]
    %v110 = vld [vmem:[#allocation7] sm:$0xf]
    %v112 = vlaneseq
    %v113 = vshrl.u32 %v112, 7
    %v114 = vsub.s32 0, %v113
    %v115 = vrot.slane %v110, %v114
    %v116 = vlaneseq
    %v117 = vshrl.u32 %v116, 7
    %v118 = vsub.s32 1, %v117
    %v119 = vrot.slane %v110, %v118
    %v120 = vlaneseq
    %v121 = vshrl.u32 %v120, 7
    %v122 = vsub.s32 2, %v121
    %v123 = vrot.slane %v110, %v122
    %v124 = vlaneseq
    %v125 = vshrl.u32 %v124, 7
    %v126 = vsub.s32 3, %v125
    %v127 = vrot.slane %v110, %v126
    %v164 = vunpack.c.l.b16 %v78
    %v165 = vunpack.c.h.b16 %v78
    %v166 = vunpack.c.l.b16 %v79
    %v167 = vunpack.c.h.b16 %v79
    %v168 = vunpack.c.l.b16 %v80
    %v169 = vunpack.c.h.b16 %v80
    %v170 = vunpack.c.l.b16 %v81
    %v171 = vunpack.c.h.b16 %v81
    %v172 = vunpack.c.l.b16 %v82
    %v173 = vunpack.c.h.b16 %v82
    %v174 = vunpack.c.l.b16 %v83
    %v175 = vunpack.c.h.b16 %v83
    %v176 = vunpack.c.l.b16 %v84
    %v177 = vunpack.c.h.b16 %v84
    %v178 = vunpack.c.l.b16 %v85
    %v179 = vunpack.c.h.b16 %v85
    %v180 = vunpack.c.l.b16 %v86
    %v181 = vunpack.c.h.b16 %v86
    %v182 = vunpack.c.l.b16 %v87
    %v183 = vunpack.c.h.b16 %v87
    %v184 = vunpack.c.l.b16 %v88
    %v185 = vunpack.c.h.b16 %v88
    %v186 = vunpack.c.l.b16 %v89
    %v187 = vunpack.c.h.b16 %v89
    %v188 = vunpack.c.l.b16 %v90
    %v189 = vunpack.c.h.b16 %v90
    %v190 = vunpack.c.l.b16 %v91
    %v191 = vunpack.c.h.b16 %v91
    %v192 = vunpack.c.l.b16 %v92
    %v193 = vunpack.c.h.b16 %v92
    %v194 = vunpack.c.l.b16 %v93
    %v195 = vunpack.c.h.b16 %v93
    %v196 = vunpack.c.l.b16 %v94
    %v197 = vunpack.c.h.b16 %v94
    %v198 = vunpack.c.l.b16 %v95
    %v199 = vunpack.c.h.b16 %v95
    %v200 = vunpack.c.l.b16 %v96
    %v201 = vunpack.c.h.b16 %v96
    %v202 = vunpack.c.l.b16 %v97
    %v203 = vunpack.c.h.b16 %v97
    %v204 = vunpack.c.l.b16 %v98
    %v205 = vunpack.c.h.b16 %v98
    %v206 = vunpack.c.l.b16 %v99
    %v207 = vunpack.c.h.b16 %v99
    %v208 = vunpack.c.l.b16 %v100
    %v209 = vunpack.c.h.b16 %v100
    %v210 = vunpack.c.l.b16 %v101
    %v211 = vunpack.c.h.b16 %v101
    %v212 = vunpack.c.l.b16 %v102
    %v213 = vunpack.c.h.b16 %v102
    %v214 = vunpack.c.l.b16 %v103
    %v215 = vunpack.c.h.b16 %v103
    %v216 = vunpack.c.l.b16 %v104
    %v217 = vunpack.c.h.b16 %v104
    %v218 = vunpack.c.l.b16 %v105
    %v219 = vunpack.c.h.b16 %v105
    %v220 = vunpack.c.l.b16 %v106
    %v221 = vunpack.c.h.b16 %v106
    %v222 = vunpack.c.l.b16 %v107
    %v223 = vunpack.c.h.b16 %v107
    %v224 = vunpack.c.l.b16 %v108
    %v225 = vunpack.c.h.b16 %v108
    %v226 = vunpack.c.l.b16 %v109
    %v227 = vunpack.c.h.b16 %v109
    %v228 = vpack.c.b16 %v168, %v164
    %v229 = vpack.c.b16 %v169, %v165
    %v230 = vpack.c.b16 %v170, %v166
    %v231 = vpack.c.b16 %v171, %v167
    %v232 = vpack.c.b16 %v176, %v172
    %v233 = vpack.c.b16 %v177, %v173
    %v234 = vpack.c.b16 %v178, %v174
    %v235 = vpack.c.b16 %v179, %v175
    %v236 = vpack.c.b16 %v184, %v180
    %v237 = vpack.c.b16 %v185, %v181
    %v238 = vpack.c.b16 %v186, %v182
    %v239 = vpack.c.b16 %v187, %v183
    %v240 = vpack.c.b16 %v192, %v188
    %v241 = vpack.c.b16 %v193, %v189
    %v242 = vpack.c.b16 %v194, %v190
    %v243 = vpack.c.b16 %v195, %v191
    %v244 = vpack.c.b16 %v200, %v196
    %v245 = vpack.c.b16 %v201, %v197
    %v246 = vpack.c.b16 %v202, %v198
    %v247 = vpack.c.b16 %v203, %v199
    %v248 = vpack.c.b16 %v208, %v204
    %v249 = vpack.c.b16 %v209, %v205
    %v250 = vpack.c.b16 %v210, %v206
    %v251 = vpack.c.b16 %v211, %v207
    %v252 = vpack.c.b16 %v216, %v212
    %v253 = vpack.c.b16 %v217, %v213
    %v254 = vpack.c.b16 %v218, %v214
    %v255 = vpack.c.b16 %v219, %v215
    %v256 = vpack.c.b16 %v224, %v220
    %v257 = vpack.c.b16 %v225, %v221
    %v258 = vpack.c.b16 %v226, %v222
    %v259 = vpack.c.b16 %v227, %v223
    %292 = vmatprep.subr.bf16.mxu0 %v257
    %293 = vmatpush1.bf16.msra.mxu0 %v256
    %294 = vmatprep.subr.bf16.mxu0 %v253
    %295 = vmatpush1.bf16.msra.mxu0 %v252
    %296 = vmatprep.subr.bf16.mxu0 %v249
    %297 = vmatpush1.bf16.msra.mxu0 %v248
    %298 = vmatprep.subr.bf16.mxu0 %v245
    %299 = vmatpush1.bf16.msra.mxu0 %v244
    %300 = vmatprep.subr.bf16.mxu0 %v241
    %301 = vmatpush1.bf16.msra.mxu0 %v240
    %302 = vmatprep.subr.bf16.mxu0 %v237
    %303 = vmatpush1.bf16.msra.mxu0 %v236
    %304 = vmatprep.subr.bf16.mxu0 %v233
    %305 = vmatpush1.bf16.msra.mxu0 %v232
    %306 = vmatprep.subr.bf16.mxu0 %v229
    %307 = vmatpush1.bf16.msra.mxu0 %v228
    %308 = vmatprep.subr.bf16.mxu0 0
    %309 = vmatpush2.bf16.msra.mxu0 0
    %310 = vmatprep.subr.bf16.mxu0 0
    %311 = vmatpush2.bf16.msra.mxu0 0
    %312 = vmatprep.subr.bf16.mxu0 0
    %313 = vmatpush2.bf16.msra.mxu0 0
    %314 = vmatprep.subr.bf16.mxu0 0
    %315 = vmatpush2.bf16.msra.mxu0 0
    %316 = vmatprep.subr.bf16.mxu0 0
    %317 = vmatpush2.bf16.msra.mxu0 0
    %318 = vmatprep.subr.bf16.mxu0 0
    %319 = vmatpush2.bf16.msra.mxu0 0
    %320 = vmatprep.subr.bf16.mxu0 0
    %321 = vmatpush2.bf16.msra.mxu0 0
    %322 = vmatprep.subr.bf16.mxu0 0
    %323 = vmatpush2.bf16.msra.mxu0 0
    %324 = vmatprep.mubr.bf16.mxu0 0
    %325 = vmatmul.mubr.bf16.gmra.mxu0 %v77
    %v326 = vpop.f32.mrf.mxu0
    %v327 = vadd.f32 %v115, %v326
    %v328 = vpop.f32.mrf.mxu0
    %v329 = vadd.f32 %v119, %v328
    %v330 = vpop.f32.mrf.mxu0
    %v331 = vadd.f32 %v115, %v330
    %v332 = vpop.f32.mrf.mxu0
    %v333 = vadd.f32 %v119, %v332
    %334 = vdwg.mxu0
    %335 = vmatprep.subr.bf16.mxu0 %v259
    %336 = vmatpush1.bf16.msra.mxu0 %v258
    %337 = vmatprep.subr.bf16.mxu0 %v255
    %338 = vmatpush1.bf16.msra.mxu0 %v254
    %339 = vmatprep.subr.bf16.mxu0 %v251
    %340 = vmatpush1.bf16.msra.mxu0 %v250
    %341 = vmatprep.subr.bf16.mxu0 %v247
    %342 = vmatpush1.bf16.msra.mxu0 %v246
    %343 = vmatprep.subr.bf16.mxu0 %v243
    %344 = vmatpush1.bf16.msra.mxu0 %v242
    %345 = vmatprep.subr.bf16.mxu0 %v239
    %346 = vmatpush1.bf16.msra.mxu0 %v238
    %347 = vmatprep.subr.bf16.mxu0 %v235
    %348 = vmatpush1.bf16.msra.mxu0 %v234
    %349 = vmatprep.subr.bf16.mxu0 %v231
    %350 = vmatpush1.bf16.msra.mxu0 %v230
    %351 = vmatprep.subr.bf16.mxu0 0
    %352 = vmatpush2.bf16.msra.mxu0 0
    %353 = vmatprep.subr.bf16.mxu0 0
    %354 = vmatpush2.bf16.msra.mxu0 0
    %355 = vmatprep.subr.bf16.mxu0 0
    %356 = vmatpush2.bf16.msra.mxu0 0
    %357 = vmatprep.subr.bf16.mxu0 0
    %358 = vmatpush2.bf16.msra.mxu0 0
    %359 = vmatprep.subr.bf16.mxu0 0
    %360 = vmatpush2.bf16.msra.mxu0 0
    %361 = vmatprep.subr.bf16.mxu0 0
    %362 = vmatpush2.bf16.msra.mxu0 0
    %363 = vmatprep.subr.bf16.mxu0 0
    %364 = vmatpush2.bf16.msra.mxu0 0
    %365 = vmatprep.subr.bf16.mxu0 0
    %366 = vmatpush2.bf16.msra.mxu0 0
    %367 = vmatprep.mubr.bf16.mxu0 0
    %368 = vmatmul.mubr.bf16.gmra.mxu0 %v77
    %v369 = vpop.f32.mrf.mxu0
    %v370 = vadd.f32 %v123, %v369
    %v371 = vpop.f32.mrf.mxu0
    %v372 = vadd.f32 %v127, %v371
    %v373 = vpop.f32.mrf.mxu0
    %v374 = vadd.f32 %v123, %v373
    %v375 = vpop.f32.mrf.mxu0
    %v376 = vadd.f32 %v127, %v375
    %377 = vdwg.mxu0
    %v378 = vmul.f32 %v327, %v327
    %v379 = vmul.f32 %v329, %v329
    %v380 = vmul.f32 %v370, %v370
    %v381 = vmul.f32 %v372, %v372
    %v382 = vmul.f32 %v331, %v331
    %v383 = vmul.f32 %v333, %v333
    %v384 = vmul.f32 %v374, %v374
    %v385 = vmul.f32 %v376, %v376
    %v386 = vmul.f32 %v378, 0.035677407
    %v387 = vmul.f32 %v379, 0.035677407
    %v388 = vmul.f32 %v380, 0.035677407
    %v389 = vmul.f32 %v381, 0.035677407
    %v390 = vmul.f32 %v382, 0.035677407
    %v391 = vmul.f32 %v383, 0.035677407
    %v392 = vmul.f32 %v384, 0.035677407
    %v393 = vmul.f32 %v385, 0.035677407
    %v394 = vadd.f32 %v386, 0.7978846
    %v395 = vadd.f32 %v387, 0.7978846
    %v396 = vadd.f32 %v388, 0.7978846
    %v397 = vadd.f32 %v389, 0.7978846
    %v398 = vadd.f32 %v390, 0.7978846
    %v399 = vadd.f32 %v391, 0.7978846
    %v400 = vadd.f32 %v392, 0.7978846
    %v401 = vadd.f32 %v393, 0.7978846
    %v402 = vmul.f32 %v327, %v394
    %v403 = vmul.f32 %v329, %v395
    %v404 = vmul.f32 %v370, %v396
    %v405 = vmul.f32 %v372, %v397
    %v406 = vmul.f32 %v331, %v398
    %v407 = vmul.f32 %v333, %v399
    %v408 = vmul.f32 %v374, %v400
    %v409 = vmul.f32 %v376, %v401
    %v410 = vmul.f32 %v327, 0.5
    %v411 = vmul.f32 %v329, 0.5
    %v412 = vmul.f32 %v370, 0.5
    %v413 = vmul.f32 %v372, 0.5
    %v414 = vmul.f32 %v331, 0.5
    %v415 = vmul.f32 %v333, 0.5
    %v416 = vmul.f32 %v374, 0.5
    %v417 = vmul.f32 %v376, 0.5
    %v418 = vtanh.pop %v402
    %v419 = vtanh.pop %v403
    %v420 = vtanh.pop %v404
    %v421 = vtanh.pop %v405
    %v422 = vtanh.pop %v406
    %v423 = vtanh.pop %v407
    %v424 = vtanh.pop %v408
    %v425 = vtanh.pop %v409
    %v426 = vadd.f32 %v418, 1.0
    %v427 = vadd.f32 %v419, 1.0
    %v428 = vadd.f32 %v420, 1.0
    %v429 = vadd.f32 %v421, 1.0
    %v430 = vadd.f32 %v422, 1.0
    %v431 = vadd.f32 %v423, 1.0
    %v432 = vadd.f32 %v424, 1.0
    %v433 = vadd.f32 %v425, 1.0
    %v434 = vmul.f32 %v410, %v426
    %v435 = vmul.f32 %v411, %v427
    %v436 = vmul.f32 %v412, %v428
    %v437 = vmul.f32 %v413, %v429
    %v438 = vmul.f32 %v414, %v430
    %v439 = vmul.f32 %v415, %v431
    %v440 = vmul.f32 %v416, %v432
    %v441 = vmul.f32 %v417, %v433
    %v442 = vpack.c.bf16 %v438, %v434
    %v443 = vpack.c.bf16 %v439, %v435
    %v444 = vpack.c.bf16 %v440, %v436
    %v445 = vpack.c.bf16 %v441, %v437
    %v446 = vld [vmem:[#allocation8] sm:$0xf]
    %v447 = vld [vmem:[#allocation8 + $0x4] sm:$0xf]
    %v448 = vld [vmem:[#allocation8 + $0x8] sm:$0xf]
    %v449 = vld [vmem:[#allocation8 + $0xc] sm:$0xf]
    %v450 = vld [vmem:[#allocation8 + $0x10] sm:$0xf]
    %v451 = vld [vmem:[#allocation8 + $0x14] sm:$0xf]
    %v452 = vld [vmem:[#allocation8 + $0x18] sm:$0xf]
    %v453 = vld [vmem:[#allocation8 + $0x1c] sm:$0xf]
    %v454 = vld [vmem:[#allocation8 + $0x20] sm:$0xf]
    %v455 = vld [vmem:[#allocation8 + $0x24] sm:$0xf]
    %v456 = vld [vmem:[#allocation8 + $0x28] sm:$0xf]
    %v457 = vld [vmem:[#allocation8 + $0x2c] sm:$0xf]
    %v458 = vld [vmem:[#allocation8 + $0x30] sm:$0xf]
    %v459 = vld [vmem:[#allocation8 + $0x34] sm:$0xf]
    %v460 = vld [vmem:[#allocation8 + $0x38] sm:$0xf]
    %v461 = vld [vmem:[#allocation8 + $0x3c] sm:$0xf]
    %v462 = vld [vmem:[#allocation8 + $0x40] sm:$0xf]
    %v463 = vld [vmem:[#allocation8 + $0x44] sm:$0xf]
    %v464 = vld [vmem:[#allocation8 + $0x48] sm:$0xf]
    %v465 = vld [vmem:[#allocation8 + $0x4c] sm:$0xf]
    %v466 = vld [vmem:[#allocation8 + $0x50] sm:$0xf]
    %v467 = vld [vmem:[#allocation8 + $0x54] sm:$0xf]
    %v468 = vld [vmem:[#allocation8 + $0x58] sm:$0xf]
    %v469 = vld [vmem:[#allocation8 + $0x5c] sm:$0xf]
    %v470 = vld [vmem:[#allocation8 + $0x60] sm:$0xf]
    %v471 = vld [vmem:[#allocation8 + $0x64] sm:$0xf]
    %v472 = vld [vmem:[#allocation8 + $0x68] sm:$0xf]
    %v473 = vld [vmem:[#allocation8 + $0x6c] sm:$0xf]
    %v474 = vld [vmem:[#allocation8 + $0x70] sm:$0xf]
    %v475 = vld [vmem:[#allocation8 + $0x74] sm:$0xf]
    %v476 = vld [vmem:[#allocation8 + $0x78] sm:$0xf]
    %v477 = vld [vmem:[#allocation8 + $0x7c] sm:$0xf]
    %v478 = vld [vmem:[#allocation8 + $0x80] sm:$0xf]
    %v479 = vld [vmem:[#allocation8 + $0x84] sm:$0xf]
    %v480 = vld [vmem:[#allocation8 + $0x88] sm:$0xf]
    %v481 = vld [vmem:[#allocation8 + $0x8c] sm:$0xf]
    %v482 = vld [vmem:[#allocation8 + $0x90] sm:$0xf]
    %v483 = vld [vmem:[#allocation8 + $0x94] sm:$0xf]
    %v484 = vld [vmem:[#allocation8 + $0x98] sm:$0xf]
    %v485 = vld [vmem:[#allocation8 + $0x9c] sm:$0xf]
    %v486 = vld [vmem:[#allocation8 + $0xa0] sm:$0xf]
    %v487 = vld [vmem:[#allocation8 + $0xa4] sm:$0xf]
    %v488 = vld [vmem:[#allocation8 + $0xa8] sm:$0xf]
    %v489 = vld [vmem:[#allocation8 + $0xac] sm:$0xf]
    %v490 = vld [vmem:[#allocation8 + $0xb0] sm:$0xf]
    %v491 = vld [vmem:[#allocation8 + $0xb4] sm:$0xf]
    %v492 = vld [vmem:[#allocation8 + $0xb8] sm:$0xf]
    %v493 = vld [vmem:[#allocation8 + $0xbc] sm:$0xf]
    %v494 = vld [vmem:[#allocation8 + $0xc0] sm:$0xf]
    %v495 = vld [vmem:[#allocation8 + $0xc4] sm:$0xf]
    %v496 = vld [vmem:[#allocation8 + $0xc8] sm:$0xf]
    %v497 = vld [vmem:[#allocation8 + $0xcc] sm:$0xf]
    %v498 = vld [vmem:[#allocation8 + $0xd0] sm:$0xf]
    %v499 = vld [vmem:[#allocation8 + $0xd4] sm:$0xf]
    %v500 = vld [vmem:[#allocation8 + $0xd8] sm:$0xf]
    %v501 = vld [vmem:[#allocation8 + $0xdc] sm:$0xf]
    %v502 = vld [vmem:[#allocation8 + $0xe0] sm:$0xf]
    %v503 = vld [vmem:[#allocation8 + $0xe4] sm:$0xf]
    %v504 = vld [vmem:[#allocation8 + $0xe8] sm:$0xf]
    %v505 = vld [vmem:[#allocation8 + $0xec] sm:$0xf]
    %v506 = vld [vmem:[#allocation8 + $0xf0] sm:$0xf]
    %v507 = vld [vmem:[#allocation8 + $0xf4] sm:$0xf]
    %v508 = vld [vmem:[#allocation8 + $0xf8] sm:$0xf]
    %v509 = vld [vmem:[#allocation8 + $0xfc] sm:$0xf]
    %v510 = vld [vmem:[%s4] sm:$0x1]
    %v512 = vlaneseq
    %v513 = vshrl.u32 %v512, 7
    %v514 = vsub.s32 0, %v513
    %v515 = vrot.slane %v510, %v514
    %v581 = vunpack.c.l.b16 %v446
    %v582 = vunpack.c.l.b16 %v447
    %v583 = vunpack.c.l.b16 %v448
    %v584 = vunpack.c.l.b16 %v449
    %v585 = vunpack.c.l.b16 %v450
    %v586 = vunpack.c.l.b16 %v451
    %v587 = vunpack.c.l.b16 %v452
    %v588 = vunpack.c.l.b16 %v453
    %v589 = vunpack.c.l.b16 %v454
    %v590 = vunpack.c.l.b16 %v455
    %v591 = vunpack.c.l.b16 %v456
    %v592 = vunpack.c.l.b16 %v457
    %v593 = vunpack.c.l.b16 %v458
    %v594 = vunpack.c.l.b16 %v459
    %v595 = vunpack.c.l.b16 %v460
    %v596 = vunpack.c.l.b16 %v461
    %v597 = vunpack.c.l.b16 %v462
    %v598 = vunpack.c.l.b16 %v463
    %v599 = vunpack.c.l.b16 %v464
    %v600 = vunpack.c.l.b16 %v465
    %v601 = vunpack.c.l.b16 %v466
    %v602 = vunpack.c.l.b16 %v467
    %v603 = vunpack.c.l.b16 %v468
    %v604 = vunpack.c.l.b16 %v469
    %v605 = vunpack.c.l.b16 %v470
    %v606 = vunpack.c.l.b16 %v471
    %v607 = vunpack.c.l.b16 %v472
    %v608 = vunpack.c.l.b16 %v473
    %v609 = vunpack.c.l.b16 %v474
    %v610 = vunpack.c.l.b16 %v475
    %v611 = vunpack.c.l.b16 %v476
    %v612 = vunpack.c.l.b16 %v477
    %v613 = vunpack.c.l.b16 %v478
    %v614 = vunpack.c.l.b16 %v479
    %v615 = vunpack.c.l.b16 %v480
    %v616 = vunpack.c.l.b16 %v481
    %v617 = vunpack.c.l.b16 %v482
    %v618 = vunpack.c.l.b16 %v483
    %v619 = vunpack.c.l.b16 %v484
    %v620 = vunpack.c.l.b16 %v485
    %v621 = vunpack.c.l.b16 %v486
    %v622 = vunpack.c.l.b16 %v487
    %v623 = vunpack.c.l.b16 %v488
    %v624 = vunpack.c.l.b16 %v489
    %v625 = vunpack.c.l.b16 %v490
    %v626 = vunpack.c.l.b16 %v491
    %v627 = vunpack.c.l.b16 %v492
    %v628 = vunpack.c.l.b16 %v493
    %v629 = vunpack.c.l.b16 %v494
    %v630 = vunpack.c.l.b16 %v495
    %v631 = vunpack.c.l.b16 %v496
    %v632 = vunpack.c.l.b16 %v497
    %v633 = vunpack.c.l.b16 %v498
    %v634 = vunpack.c.l.b16 %v499
    %v635 = vunpack.c.l.b16 %v500
    %v636 = vunpack.c.l.b16 %v501
    %v637 = vunpack.c.l.b16 %v502
    %v638 = vunpack.c.l.b16 %v503
    %v639 = vunpack.c.l.b16 %v504
    %v640 = vunpack.c.l.b16 %v505
    %v641 = vunpack.c.l.b16 %v506
    %v642 = vunpack.c.l.b16 %v507
    %v643 = vunpack.c.l.b16 %v508
    %v644 = vunpack.c.l.b16 %v509
    %v645 = vpack.c.b16 %v582, %v581
    %v646 = vpack.c.b16 %v584, %v583
    %v647 = vpack.c.b16 %v586, %v585
    %v648 = vpack.c.b16 %v588, %v587
    %v649 = vpack.c.b16 %v590, %v589
    %v650 = vpack.c.b16 %v592, %v591
    %v651 = vpack.c.b16 %v594, %v593
    %v652 = vpack.c.b16 %v596, %v595
    %v653 = vpack.c.b16 %v598, %v597
    %v654 = vpack.c.b16 %v600, %v599
    %v655 = vpack.c.b16 %v602, %v601
    %v656 = vpack.c.b16 %v604, %v603
    %v657 = vpack.c.b16 %v606, %v605
    %v658 = vpack.c.b16 %v608, %v607
    %v659 = vpack.c.b16 %v610, %v609
    %v660 = vpack.c.b16 %v612, %v611
    %v661 = vpack.c.b16 %v614, %v613
    %v662 = vpack.c.b16 %v616, %v615
    %v663 = vpack.c.b16 %v618, %v617
    %v664 = vpack.c.b16 %v620, %v619
    %v665 = vpack.c.b16 %v622, %v621
    %v666 = vpack.c.b16 %v624, %v623
    %v667 = vpack.c.b16 %v626, %v625
    %v668 = vpack.c.b16 %v628, %v627
    %v669 = vpack.c.b16 %v630, %v629
    %v670 = vpack.c.b16 %v632, %v631
    %v671 = vpack.c.b16 %v634, %v633
    %v672 = vpack.c.b16 %v636, %v635
    %v673 = vpack.c.b16 %v638, %v637
    %v674 = vpack.c.b16 %v640, %v639
    %v675 = vpack.c.b16 %v642, %v641
    %v676 = vpack.c.b16 %v644, %v643
    %709 = vmatprep.subr.bf16.mxu0 0
    %710 = vmatpush1.bf16.msra.mxu0 %v652
    %711 = vmatprep.subr.bf16.mxu0 0
    %712 = vmatpush1.bf16.msra.mxu0 %v651
    %713 = vmatprep.subr.bf16.mxu0 0
    %714 = vmatpush1.bf16.msra.mxu0 %v650
    %715 = vmatprep.subr.bf16.mxu0 0
    %716 = vmatpush1.bf16.msra.mxu0 %v649
    %717 = vmatprep.subr.bf16.mxu0 0
    %718 = vmatpush1.bf16.msra.mxu0 %v648
    %719 = vmatprep.subr.bf16.mxu0 0
    %720 = vmatpush1.bf16.msra.mxu0 %v647
    %721 = vmatprep.subr.bf16.mxu0 0
    %722 = vmatpush1.bf16.msra.mxu0 %v646
    %723 = vmatprep.subr.bf16.mxu0 0
    %724 = vmatpush1.bf16.msra.mxu0 %v645
    %725 = vmatprep.subr.bf16.mxu0 0
    %726 = vmatpush2.bf16.msra.mxu0 %v660
    %727 = vmatprep.subr.bf16.mxu0 0
    %728 = vmatpush2.bf16.msra.mxu0 %v659
    %729 = vmatprep.subr.bf16.mxu0 0
    %730 = vmatpush2.bf16.msra.mxu0 %v658
    %731 = vmatprep.subr.bf16.mxu0 0
    %732 = vmatpush2.bf16.msra.mxu0 %v657
    %733 = vmatprep.subr.bf16.mxu0 0
    %734 = vmatpush2.bf16.msra.mxu0 %v656
    %735 = vmatprep.subr.bf16.mxu0 0
    %736 = vmatpush2.bf16.msra.mxu0 %v655
    %737 = vmatprep.subr.bf16.mxu0 0
    %738 = vmatpush2.bf16.msra.mxu0 %v654
    %739 = vmatprep.subr.bf16.mxu0 0
    %740 = vmatpush2.bf16.msra.mxu0 %v653
    %741 = vmatprep.mubr.bf16.mxu0 %v443
    %742 = vmatmul.mubr.bf16.gmra.mxu0 %v442
    %v743 = vpop.f32.mrf.mxu0
    %v744 = vadd.f32 %v515, %v743
    %v745 = vpop.f32.mrf.mxu0
    %v746 = vpop.f32.mrf.mxu0
    %v747 = vadd.f32 %v515, %v746
    %v748 = vpop.f32.mrf.mxu0
    %749 = vdwg.mxu0
    %750 = vmatprep.subr.bf16.mxu0 0
    %751 = vmatpush1.bf16.msra.mxu0 %v668
    %752 = vmatprep.subr.bf16.mxu0 0
    %753 = vmatpush1.bf16.msra.mxu0 %v667
    %754 = vmatprep.subr.bf16.mxu0 0
    %755 = vmatpush1.bf16.msra.mxu0 %v666
    %756 = vmatprep.subr.bf16.mxu0 0
    %757 = vmatpush1.bf16.msra.mxu0 %v665
    %758 = vmatprep.subr.bf16.mxu0 0
    %759 = vmatpush1.bf16.msra.mxu0 %v664
    %760 = vmatprep.subr.bf16.mxu0 0
    %761 = vmatpush1.bf16.msra.mxu0 %v663
    %762 = vmatprep.subr.bf16.mxu0 0
    %763 = vmatpush1.bf16.msra.mxu0 %v662
    %764 = vmatprep.subr.bf16.mxu0 0
    %765 = vmatpush1.bf16.msra.mxu0 %v661
    %766 = vmatprep.subr.bf16.mxu0 0
    %767 = vmatpush2.bf16.msra.mxu0 %v676
    %768 = vmatprep.subr.bf16.mxu0 0
    %769 = vmatpush2.bf16.msra.mxu0 %v675
    %770 = vmatprep.subr.bf16.mxu0 0
    %771 = vmatpush2.bf16.msra.mxu0 %v674
    %772 = vmatprep.subr.bf16.mxu0 0
    %773 = vmatpush2.bf16.msra.mxu0 %v673
    %774 = vmatprep.subr.bf16.mxu0 0
    %775 = vmatpush2.bf16.msra.mxu0 %v672
    %776 = vmatprep.subr.bf16.mxu0 0
    %777 = vmatpush2.bf16.msra.mxu0 %v671
    %778 = vmatprep.subr.bf16.mxu0 0
    %779 = vmatpush2.bf16.msra.mxu0 %v670
    %780 = vmatprep.subr.bf16.mxu0 0
    %781 = vmatpush2.bf16.msra.mxu0 %v669
    %782 = vmatprep.mubr.bf16.mxu0 %v445
    %783 = vmatmul.mubr.bf16.gmra.mxu0 %v444
    %v784 = vpop.f32.mrf.mxu0
    %v785 = vadd.f32 %v744, %v784
    %v786 = vpop.f32.mrf.mxu0
    %v787 = vpop.f32.mrf.mxu0
    %v788 = vadd.f32 %v747, %v787
    %v789 = vpop.f32.mrf.mxu0
    %790 = vdwg.mxu0
    %791 = vst [vmem:[#allocation10] sm:$0xff] %v785
    %792 = vst [vmem:[#allocation10 + $0x8] sm:$0xff] %v788
    // Predicated region
    $region38: #{tpu_custom_call.1} parent=1 // pred_check
      _
    $region39: #{tpu_custom_call.1} parent=1 // pred_check_branch
      %794 = sbr.rel (0) target = $region41
    $region40: #{tpu_custom_call.1} parent=1 // pred_region
      %s796 = ssub.s32 256, 256
      %797 = vsyncadd [#allocation4], %s796
      %s798 = sshll.u32 [#allocation10], 4
      %s799 = int_to_ptr.vmem [resolvable:$true] %s798
      %804 = dma.vmem_to_hbm [thread:$0]  %s799, 256, %s5, [#allocation4], 128, 128, 8
    $region41: #{tpu_custom_call.1} parent=1 // pred_fallthru
      _
    // Predicated region
    $region42: #{tpu_custom_call.1} parent=1 // pred_check
      _
    $region43: #{tpu_custom_call.1} parent=1 // pred_check_branch
      %806 = sbr.rel (0) target = $region45
    $region44: #{tpu_custom_call.1} parent=1 // pred_region
      %807 = dma.done [#allocation4], 256
    $region45: #{tpu_custom_call.1} parent=1 // pred_fallthru
      _
    %808 = vsyncpa [#allocation3], 1
    %809 = vsyncpa [#allocation6], 1
    %810 = vsyncpa [#allocation9], 1
    %811 = vsyncpa [#allocation4], 1

</llo_original>
